<compile_context>
chip_gen: v5e
topology: v5e:2x2
jax: 0.10.0
libtpu: 0.0.40
codegen_flags: <defaults>
</compile_context>

<pallas_src>
import math
import functools

import jax
import jax.numpy as jnp
from jax import lax
from jax.experimental import pallas as pl
from jax.experimental.pallas import tpu as pltpu


_NEG_INF = -1e30

# One-shot switch: single-buffer grid-invariant operands via pipeline_mode=pl.Buffered(1).
# If the installed Pallas build rejects it, we fall back (once) to default double-buffering.
_SINGLE_BUFFER = [True]


def _const_spec(shape, index_map, single_buffer):
    """BlockSpec for a grid-invariant operand (constant block index)."""
    if single_buffer:
        return pl.BlockSpec(shape, index_map, pipeline_mode=pl.Buffered(1))
    return pl.BlockSpec(shape, index_map)


# --------------------------------------------------------------------------------------
# Kernel A: LayerNorm1 + fused QKV projection + in-kernel head split
# --------------------------------------------------------------------------------------
def _ln_qkv_kernel(x_ref, g_ref, b_ref, wqkv_ref, q_ref, k_ref, v_ref, *,
                   n_head, head_size):
    C = n_head * head_size
    x = x_ref[0].astype(jnp.float32)                          # (TA, C)
    mu = jnp.mean(x, axis=-1, keepdims=True)
    var = jnp.mean((x - mu) ** 2, axis=-1, keepdims=True)
    h = (x - mu) * lax.rsqrt(var + 1e-5)
    h = (h * g_ref[...] + b_ref[...]).astype(wqkv_ref.dtype)  # bf16 MXU operands (perf path)
    qkv = jnp.dot(h, wqkv_ref[...], preferred_element_type=jnp.float32)   # (TA, 3C)
    qkv = qkv.astype(q_ref.dtype)
    # Head split done here (layout only) so Q/K/V land in HBM already head-major:
    # eliminates the host-side reshape/transpose HBM round trip between kernels A and B.
    for hh in range(n_head):
        q_ref[0, hh] = qkv[:, hh * head_size:(hh + 1) * head_size]
        k_ref[0, hh] = qkv[:, C + hh * head_size:C + (hh + 1) * head_size]
        v_ref[0, hh] = qkv[:, 2 * C + hh * head_size:2 * C + (hh + 1) * head_size]


# --------------------------------------------------------------------------------------
# Kernel B: attention (heads batched) + residual + LayerNorm2 + MLP + residual
# --------------------------------------------------------------------------------------
def _attn_mlp_kernel(x_ref, q_ref, k_ref, v_ref,
                     wo3_ref, ln2g_ref, ln2b_ref,
                     w1_ref, b1_ref, w2_ref, b2_ref,
                     o_ref, *, n_head, t_valid, t_total, approx_recip):
    x = x_ref[0].astype(jnp.float32)                          # (TQ, C)  residual input
    q = q_ref[0]                                              # (nh, TQ, hs) — 1/sqrt(hs) folded into Wq
    k = k_ref[0]                                              # (nh, Tp, hs)
    v = v_ref[0]                                              # (nh, Tp, hs)

    # Scores for all heads in one batched contraction (no explicit K transpose, no scale mul).
    s = jnp.einsum("hqd,hkd->hqk", q, k,
                   preferred_element_type=jnp.float32)        # (nh, TQ, Tp) f32
    # Reference's `score.masked_fill(mask, -inf)` result is discarded -> user mask is a no-op.
    # Only sequence padding (if any) is masked so it cannot perturb real rows.
    if t_total > t_valid:
        kidx = lax.broadcasted_iota(jnp.int32, (1, 1, t_total), 2)
        s = jnp.where(kidx < t_valid, s, _NEG_INF)
    s = s - jnp.max(s, axis=-1, keepdims=True)
    e = jnp.exp(s)
    denom = jnp.sum(e, axis=-1, keepdims=True)
    p = e * pl.reciprocal(denom, approx=approx_recip)         # EUP reciprocal on perf path

    o = jnp.einsum("hqk,hkd->hqd", p.astype(v.dtype), v,
                   preferred_element_type=jnp.float32)        # (nh, TQ, hs) f32

    # Output projection: sum_h o_h @ Wo_h, accumulated head-by-head into one (TQ, C) f32
    # buffer (no (nh, TQ, C) intermediate, no extra VPU reduce over heads).
    attn = jnp.dot(o[0].astype(wo3_ref.dtype), wo3_ref[0],
                   preferred_element_type=jnp.float32)
    for hh in range(1, n_head):
        attn = attn + jnp.dot(o[hh].astype(wo3_ref.dtype), wo3_ref[hh],
                              preferred_element_type=jnp.float32)
    # attn dropout: identity (eval mode)
    x1 = x + attn                                             # residual 1

    # ---- LayerNorm 2 ----
    mu2 = jnp.mean(x1, axis=-1, keepdims=True)
    var2 = jnp.mean((x1 - mu2) ** 2, axis=-1, keepdims=True)
    h2 = (x1 - mu2) * lax.rsqrt(var2 + 1e-5)
    h2 = h2 * ln2g_ref[...] + ln2b_ref[...]

    # ---- MLP: Linear -> GELU(exact) -> Linear ----
    u = jnp.dot(h2.astype(w1_ref.dtype), w1_ref[...],
                preferred_element_type=jnp.float32) + b1_ref[...]
    u = 0.5 * u * (1.0 + lax.erf(u * (1.0 / math.sqrt(2.0))))
    y = jnp.dot(u.astype(w2_ref.dtype), w2_ref[...],
                preferred_element_type=jnp.float32) + b2_ref[...]
    # mlp dropout: identity (eval mode)

    o_ref[0] = (x1 + y).astype(o_ref.dtype)                   # residual 2


# --------------------------------------------------------------------------------------
# Tile / VMEM sizing helpers (generation-aware)
# --------------------------------------------------------------------------------------
def _round_up(n, m):
    return ((n + m - 1) // m) * m


def _vmem_budget_bytes():
    try:
        return int(pltpu.get_tpu_info().vmem_capacity_bytes)   # 128 MiB v5e/v6e, 64 MiB v7x
    except Exception:
        return 64 << 20                                        # conservative (v7x-safe)


def _vmem_limit_bytes(per_step_bytes, budget):
    need = 2 * int(per_step_bytes) + (8 << 20)                 # double-buffering + headroom
    cap = max(budget - (4 << 20), 16 << 20)
    return int(min(max(need, 16 << 20), cap))


def _tile_candidates(total, cap):
    return [t for t in (1024, 512, 256, 128, 64, 32, 16, 8) if t <= cap and total % t == 0]


def _pick_tile_a(Tp, C, cbytes, budget, batch):
    """Kernel A (LN + GEMM) is mem-bound with a tiny footprint -> large row tiles."""
    cands = _tile_candidates(Tp, 1024) or [Tp]
    ta = cands[-1]
    for t in cands:
        per = (t * C * 4 + 3 * C * C * cbytes + t * 3 * C * 4 + 3 * t * C * cbytes + 2 * C * 4)
        if 2 * per + (8 << 20) <= budget:
            ta = t
            break
    while batch * (Tp // ta) < 2 and ta > 8:                   # expose work for 2nd TC (v7x)
        ta //= 2
    return ta


def _pick_tile_b(Tp, C, nh, hs, cbytes, budget, batch):
    """Kernel B tile is bounded by the (nh, TQ, Tp) f32 score buffer + resident K/V + weights."""
    cands = _tile_candidates(Tp, 512) or [Tp]
    tq = cands[-1]
    for t in cands:
        per = (t * C * 4 * 2                                   # x tile + out tile (f32)
               + (nh * t * hs + 2 * nh * Tp * hs) * cbytes     # q tile + full-T K/V
               + 9 * C * C * cbytes                            # wo3 + w1 + w2
               + 10 * C * 4                                    # ln2 params + biases
               + 2 * nh * t * Tp * 4                           # scores + probs (f32)
               + 2 * t * 4 * C * 4)                            # MLP intermediates (f32)
        if 2 * per + (8 << 20) <= budget:
            tq = t
            break
    while batch * (Tp // tq) < 2 and tq > 8:                   # expose work for 2nd TC (v7x)
        tq //= 2
    return tq


# --------------------------------------------------------------------------------------
# Parameter preparation (hoisted out of the per-forward path) and forward
# --------------------------------------------------------------------------------------
def prepare_block_params(params, *, n_head, compute_dtype=jnp.bfloat16):
    """One-time weight layout / casting.  Folds 1/sqrt(head_size) into Wq BEFORE the
    low-precision cast (avoids double rounding)."""
    C = params["wq"].shape[0]
    assert C % n_head == 0, "emb_dim must be divisible by n_head"
    hs = C // n_head
    cdt = jnp.dtype(compute_dtype)
    scale = 1.0 / math.sqrt(hs)
    wqkv = jnp.concatenate([params["wq"] * scale, params["wk"], params["wv"]],
                           axis=1).astype(cdt)                 # (C, 3C), q|k|v
    # TODO(synk): for large C (e.g. >= 4096) tile the 3C / 4C output columns of the GEMMs as an
    #             extra grid axis; wqkv / w1 no longer fit VMEM as single resident blocks.
    return {
        "wqkv": wqkv,
        "wo3": params["wo"].reshape(n_head, hs, C).astype(cdt),
        "w1": params["w1"].astype(cdt),
        "w2": params["w2"].astype(cdt),
        "ln1_g": params["ln1_g"].astype(jnp.float32),
        "ln1_b": params["ln1_b"].astype(jnp.float32),
        "ln2_g": params["ln2_g"].astype(jnp.float32),
        "ln2_b": params["ln2_b"].astype(jnp.float32),
        "b1": params["b1"].astype(jnp.float32),
        "b2": params["b2"].astype(jnp.float32),
        "n_head": n_head,
        "compute_dtype": cdt,
    }


def block_forward(x, prep, mask=None):
    """Pallas Block forward.  `mask` is accepted for signature parity but unused
    (the reference's masked_fill is a no-op)."""
    del mask
    B, T, C = x.shape
    n_head = prep["n_head"]
    hs = C // n_head
    cdt = prep["compute_dtype"]
    cbytes = jnp.dtype(cdt).itemsize

    # Pad sequence axis to a sublane multiple so the steady-state tile holds for ragged T.
    # (Padded key columns are masked inside kernel B; padded query rows are sliced off.)
    Tp = max(_round_up(T, 8), 8)
    x_p = x if Tp == T else jnp.pad(x, ((0, 0), (0, Tp - T), (0, 0)))

    budget = _vmem_budget_bytes()
    TA = _pick_tile_a(Tp, C, cbytes, budget, B)
    TQ = _pick_tile_b(Tp, C, n_head, hs, cbytes, budget, B)
    nA = Tp // TA
    nQ = Tp // TQ

    def run(single_buffer):
        # ---------------- Kernel A: LN1 + fused QKV projection + head split ----------------
        a_bytes = (TA * C * 4 + 3 * C * C * cbytes + TA * 3 * C * 4
                   + 3 * TA * C * cbytes + 2 * C * 4)
        qkv_out = pl.pallas_call(
            functools.partial(_ln_qkv_kernel, n_head=n_head, head_size=hs),
            out_shape=tuple(jax.ShapeDtypeStruct((B, n_head, Tp, hs), cdt) for _ in range(3)),
            grid_spec=pltpu.PrefetchScalarGridSpec(
                num_scalar_prefetch=0,
                grid=(B, nA),
                in_specs=[
                    pl.BlockSpec((1, TA, C), lambda b, t: (b, t, 0)),
                    _const_spec(prep["ln1_g"].shape, lambda b, t: (0, 0), single_buffer),
                    _const_spec(prep["ln1_b"].shape, lambda b, t: (0, 0), single_buffer),
                    _const_spec(prep["wqkv"].shape, lambda b, t: (0, 0), single_buffer),
                ],
                out_specs=tuple(pl.BlockSpec((1, n_head, TA, hs), lambda b, t: (b, 0, t, 0))
                                for _ in range(3)),
            ),
            compiler_params=pltpu.CompilerParams(
                dimension_semantics=("parallel", "parallel"),
                vmem_limit_bytes=_vmem_limit_bytes(a_bytes, budget),
            ),
        )(x_p, prep["ln1_g"], prep["ln1_b"], prep["wqkv"])
        q4, k4, v4 = qkv_out

        # ---------------- Kernel B: attention + residual + LN2 + MLP + residual -------------
        b_bytes = (TQ * C * 4 * 2
                   + (n_head * TQ * hs + 2 * n_head * Tp * hs) * cbytes
                   + 9 * C * C * cbytes
                   + 10 * C * 4
                   + 2 * n_head * TQ * Tp * 4
                   + 2 * TQ * 4 * C * 4)
        kern_b = functools.partial(
            _attn_mlp_kernel, n_head=n_head, t_valid=T, t_total=Tp,
            approx_recip=(cdt != jnp.dtype(jnp.float32)))
        out = pl.pallas_call(
            kern_b,
            out_shape=jax.ShapeDtypeStruct((B, Tp, C), x.dtype),
            grid_spec=pltpu.PrefetchScalarGridSpec(
                num_scalar_prefetch=0,
                grid=(B, nQ),
                in_specs=[
                    pl.BlockSpec((1, TQ, C), lambda b, q: (b, q, 0)),              # x (residual)
                    pl.BlockSpec((1, n_head, TQ, hs), lambda b, q: (b, 0, q, 0)),  # Q tile
                    # K/V vary along the batch grid axis -> keep them double-buffered.
                    pl.BlockSpec((1, n_head, Tp, hs), lambda b, q: (b, 0, 0, 0)),  # K (full T)
                    pl.BlockSpec((1, n_head, Tp, hs), lambda b, q: (b, 0, 0, 0)),  # V (full T)
                    _const_spec(prep["wo3"].shape, lambda b, q: (0, 0, 0), single_buffer),
                    _const_spec(prep["ln2_g"].shape, lambda b, q: (0, 0), single_buffer),
                    _const_spec(prep["ln2_b"].shape, lambda b, q: (0, 0), single_buffer),
                    _const_spec(prep["w1"].shape, lambda b, q: (0, 0), single_buffer),
                    _const_spec(prep["b1"].shape, lambda b, q: (0, 0), single_buffer),
                    _const_spec(prep["w2"].shape, lambda b, q: (0, 0), single_buffer),
                    _const_spec(prep["b2"].shape, lambda b, q: (0, 0), single_buffer),
                ],
                out_specs=pl.BlockSpec((1, TQ, C), lambda b, q: (b, q, 0)),
            ),
            compiler_params=pltpu.CompilerParams(
                dimension_semantics=("parallel", "parallel"),
                vmem_limit_bytes=_vmem_limit_bytes(b_bytes, budget),
            ),
        )(x_p, q4, k4, v4, prep["wo3"], prep["ln2_g"], prep["ln2_b"],
          prep["w1"], prep["b1"], prep["w2"], prep["b2"])
        return out

    if _SINGLE_BUFFER[0]:
        try:
            out = run(True)
        except Exception:
            _SINGLE_BUFFER[0] = False   # build rejects pipeline_mode; use default buffering
            out = run(False)
    else:
        out = run(False)

    return out if Tp == T else out[:, :T, :]


# --------------------------------------------------------------------------------------
# Params + pure-JAX reference
# --------------------------------------------------------------------------------------
def make_params(key, emb_dim):
    """Deterministic synthetic parameters (PyTorch-like shapes, stored (in, out), f32)."""
    C = emb_dim
    ks = jax.random.split(key, 8)
    scale = 1.0 / math.sqrt(C)

    def lin(k, din, dout):
        return jax.random.uniform(k, (din, dout), jnp.float32,
                                  -1.0 / math.sqrt(din), 1.0 / math.sqrt(din))

    return {
        "ln1_g": jnp.ones((1, C), jnp.float32),
        "ln1_b": jnp.zeros((1, C), jnp.float32),
        "ln2_g": jnp.ones((1, C), jnp.float32),
        "ln2_b": jnp.zeros((1, C), jnp.float32),
        "wk": lin(ks[0], C, C),            # key_proj   (value_dim == emb_dim)
        "wq": lin(ks[1], C, C),            # query_proj (query_dim == emb_dim)
        "wv": lin(ks[2], C, C),            # value_proj
        "wo": lin(ks[3], C, C),            # final_proj
        "w1": lin(ks[4], C, 4 * C),        # mlp fc1
        "b1": jax.random.uniform(ks[5], (1, 4 * C), jnp.float32, -scale, scale),
        "w2": lin(ks[6], 4 * C, C),        # mlp fc2
        "b2": jax.random.uniform(ks[7], (1, C), jnp.float32,
                                 -1.0 / math.sqrt(4 * C), 1.0 / math.sqrt(4 * C)),
    }


def block_reference(x, params, n_head):
    """Pure-JAX reference mirroring the PyTorch forward (eval mode, mask is a no-op)."""
    B, T, C = x.shape
    hs = C // n_head

    def ln(z, g, b):
        mu = jnp.mean(z, -1, keepdims=True)
        var = jnp.mean((z - mu) ** 2, -1, keepdims=True)
        return (z - mu) / jnp.sqrt(var + 1e-5) * g + b

    h = ln(x, params["ln1_g"], params["ln1_b"])
    k = (h @ params["wk"]).reshape(B, T, n_head, hs).transpose(0, 2, 1, 3)
    q = (h @ params["wq"]).reshape(B, T, n_head, hs).transpose(0, 2, 1, 3)
    v = (h @ params["wv"]).reshape(B, T, n_head, hs).transpose(0, 2, 1, 3)
    s = jnp.einsum("bhqd,bhkd->bhqk", q, k) / math.sqrt(hs)
    e = jax.nn.softmax(s, axis=-1)
    o = jnp.einsum("bhqk,bhkd->bhqd", e, v).transpose(0, 2, 1, 3).reshape(B, T, C)
    x1 = x + o @ params["wo"]
    h2 = ln(x1, params["ln2_g"], params["ln2_b"])
    u = jax.nn.gelu(h2 @ params["w1"] + params["b1"], approximate=False)
    return x1 + u @ params["w2"] + params["b2"]


if __name__ == "__main__":
    B, T, C = 2, 8, 32
    N_HEAD = 4

    key = jax.random.PRNGKey(0)
    kx, kp = jax.random.split(key)
    x = jax.random.normal(kx, (B, T, C), jnp.float32)
    params = make_params(kp, C)
    # causal mask (ignored — the reference's masked_fill result is discarded)
    mask = jnp.triu(jnp.ones((T, T), jnp.bool_), k=1)

    ref = block_reference(x, params, N_HEAD)

    # Exact-precision path (f32 matmul operands) — tight correctness check.
    prep_f32 = prepare_block_params(params, n_head=N_HEAD, compute_dtype=jnp.float32)
    out_f32 = jax.block_until_ready(block_forward(x, prep_f32, mask))
    assert out_f32.shape == (B, T, C)
    assert jnp.allclose(out_f32, ref, atol=2e-4, rtol=2e-4), "f32 mismatch vs reference"

    # Performance path (bf16 matmul operands, f32 accumulation) — loose check.
    prep_bf16 = prepare_block_params(params, n_head=N_HEAD, compute_dtype=jnp.bfloat16)
    out_bf16 = jax.block_until_ready(block_forward(x, prep_bf16, mask))
    assert out_bf16.shape == (B, T, C)
    assert jnp.allclose(out_bf16, ref, atol=1.5e-1, rtol=5e-2), "bf16 mismatch vs reference"

    print("KERNEL_OK")
</pallas_src>

<mosaic_0001>
module attributes {stable_mosaic.version = 11 : i64} {
  func.func @_ln_qkv_kernel(%arg0: i32, %arg1: i32, %arg2: memref<1x8x32xf32, #tpu.memory_space<vmem>>, %arg3: memref<1x32xf32, #tpu.memory_space<vmem>>, %arg4: memref<1x32xf32, #tpu.memory_space<vmem>>, %arg5: memref<32x96xf32, #tpu.memory_space<vmem>>, %arg6: memref<1x4x8x8xf32, #tpu.memory_space<vmem>>, %arg7: memref<1x4x8x8xf32, #tpu.memory_space<vmem>>, %arg8: memref<1x4x8x8xf32, #tpu.memory_space<vmem>>) attributes {dimension_semantics = [#tpu.dimension_semantics<parallel>, #tpu.dimension_semantics<parallel>], iteration_bounds = array<i64: 2, 1>, scalar_prefetch = 0 : i64, scratch_operands = 0 : i64, tpu.core_type = #tpu.core_type<tc>, window_params = [{transform_indices = @transform_0, window_bounds = array<i64: 1, 8, 32>}, {pipeline_mode = #tpu.pipeline_mode<synchronous>, transform_indices = @transform_1, window_bounds = array<i64: 1, 32>}, {pipeline_mode = #tpu.pipeline_mode<synchronous>, transform_indices = @transform_2, window_bounds = array<i64: 1, 32>}, {pipeline_mode = #tpu.pipeline_mode<synchronous>, transform_indices = @transform_3, window_bounds = array<i64: 32, 96>}, {transform_indices = @transform_4, window_bounds = array<i64: 1, 4, 8, 8>}, {transform_indices = @transform_5, window_bounds = array<i64: 1, 4, 8, 8>}, {transform_indices = @transform_6, window_bounds = array<i64: 1, 4, 8, 8>}]} {
    %c0 = arith.constant 0 : index
    %c0_0 = arith.constant 0 : index
    %c0_1 = arith.constant 0 : index
    %0 = vector.load %arg2[%c0, %c0_0, %c0_1] : memref<1x8x32xf32, #tpu.memory_space<vmem>>, vector<1x8x32xf32>
    %1 = vector.shape_cast %0 : vector<1x8x32xf32> to vector<8x32xf32>
    %cst = arith.constant dense<0.000000e+00> : vector<8xf32>
    %2 = vector.multi_reduction <add>, %1, %cst [1] : vector<8x32xf32> to vector<8xf32>
    %3 = vector.shape_cast %2 : vector<8xf32> to vector<8x1xf32>
    %cst_2 = arith.constant 3.200000e+01 : f32
    %4 = vector.broadcast %cst_2 : f32 to vector<8x1xf32>
    %5 = arith.divf %3, %4 : vector<8x1xf32>
    %6 = vector.broadcast %5 : vector<8x1xf32> to vector<8x32xf32>
    %7 = arith.subf %1, %6 : vector<8x32xf32>
    %8 = arith.mulf %7, %7 : vector<8x32xf32>
    %cst_3 = arith.constant dense<0.000000e+00> : vector<8xf32>
    %9 = vector.multi_reduction <add>, %8, %cst_3 [1] : vector<8x32xf32> to vector<8xf32>
    %10 = vector.shape_cast %9 : vector<8xf32> to vector<8x1xf32>
    %cst_4 = arith.constant 3.200000e+01 : f32
    %11 = vector.broadcast %cst_4 : f32 to vector<8x1xf32>
    %12 = arith.divf %10, %11 : vector<8x1xf32>
    %13 = vector.broadcast %5 : vector<8x1xf32> to vector<8x32xf32>
    %14 = arith.subf %1, %13 : vector<8x32xf32>
    %cst_5 = arith.constant 9.99999974E-6 : f32
    %15 = vector.broadcast %cst_5 : f32 to vector<8x1xf32>
    %16 = arith.addf %12, %15 : vector<8x1xf32>
    %17 = math.rsqrt %16 : vector<8x1xf32>
    %18 = vector.broadcast %17 : vector<8x1xf32> to vector<8x32xf32>
    %19 = arith.mulf %14, %18 : vector<8x32xf32>
    %c0_6 = arith.constant 0 : index
    %c0_7 = arith.constant 0 : index
    %20 = vector.load %arg3[%c0_6, %c0_7] : memref<1x32xf32, #tpu.memory_space<vmem>>, vector<1x32xf32>
    %21 = vector.broadcast %20 : vector<1x32xf32> to vector<8x32xf32>
    %22 = arith.mulf %19, %21 : vector<8x32xf32>
    %c0_8 = arith.constant 0 : index
    %c0_9 = arith.constant 0 : index
    %23 = vector.load %arg4[%c0_8, %c0_9] : memref<1x32xf32, #tpu.memory_space<vmem>>, vector<1x32xf32>
    %24 = vector.broadcast %23 : vector<1x32xf32> to vector<8x32xf32>
    %25 = arith.addf %22, %24 : vector<8x32xf32>
    %c0_10 = arith.constant 0 : index
    %c0_11 = arith.constant 0 : index
    %26 = vector.load %arg5[%c0_10, %c0_11] : memref<32x96xf32, #tpu.memory_space<vmem>>, vector<32x96xf32>
    %cst_12 = arith.constant dense<0.000000e+00> : vector<8x96xf32>
    %27 = tpu.matmul %25, %26, %cst_12 {dimension_numbers = #tpu.dot_dimension_numbers<[1], [0], [0], [1], [0, 0, 1, 1], [], []>} : vector<8x32xf32>, vector<32x96xf32>, vector<8x96xf32> -> vector<8x96xf32>
    %28 = vector.extract_strided_slice %27 {offsets = [0, 0], sizes = [8, 8], strides = [1, 1]} : vector<8x96xf32> to vector<8x8xf32>
    %c0_13 = arith.constant 0 : index
    %c0_14 = arith.constant 0 : index
    %c0_15 = arith.constant 0 : index
    %c0_16 = arith.constant 0 : index
    %29 = vector.load %arg6[%c0_13, %c0_14, %c0_15, %c0_16] : memref<1x4x8x8xf32, #tpu.memory_space<vmem>>, vector<1x1x8x8xf32>
    %30 = vector.shape_cast %29 : vector<1x1x8x8xf32> to vector<8x8xf32>
    %31 = vector.shape_cast %28 : vector<8x8xf32> to vector<1x1x8x8xf32>
    tpu.vector_store %arg6[%c0_13, %c0_14, %c0_15, %c0_16], %31 {strides = array<i32>} : memref<1x4x8x8xf32, #tpu.memory_space<vmem>>, vector<1x1x8x8xf32>,
    %32 = vector.extract_strided_slice %27 {offsets = [0, 32], sizes = [8, 8], strides = [1, 1]} : vector<8x96xf32> to vector<8x8xf32>
    %c0_17 = arith.constant 0 : index
    %c0_18 = arith.constant 0 : index
    %c0_19 = arith.constant 0 : index
    %c0_20 = arith.constant 0 : index
    %33 = vector.load %arg7[%c0_17, %c0_18, %c0_19, %c0_20] : memref<1x4x8x8xf32, #tpu.memory_space<vmem>>, vector<1x1x8x8xf32>
    %34 = vector.shape_cast %33 : vector<1x1x8x8xf32> to vector<8x8xf32>
    %35 = vector.shape_cast %32 : vector<8x8xf32> to vector<1x1x8x8xf32>
    tpu.vector_store %arg7[%c0_17, %c0_18, %c0_19, %c0_20], %35 {strides = array<i32>} : memref<1x4x8x8xf32, #tpu.memory_space<vmem>>, vector<1x1x8x8xf32>,
    %36 = vector.extract_strided_slice %27 {offsets = [0, 64], sizes = [8, 8], strides = [1, 1]} : vector<8x96xf32> to vector<8x8xf32>
    %c0_21 = arith.constant 0 : index
    %c0_22 = arith.constant 0 : index
    %c0_23 = arith.constant 0 : index
    %c0_24 = arith.constant 0 : index
    %37 = vector.load %arg8[%c0_21, %c0_22, %c0_23, %c0_24] : memref<1x4x8x8xf32, #tpu.memory_space<vmem>>, vector<1x1x8x8xf32>
    %38 = vector.shape_cast %37 : vector<1x1x8x8xf32> to vector<8x8xf32>
    %39 = vector.shape_cast %36 : vector<8x8xf32> to vector<1x1x8x8xf32>
    tpu.vector_store %arg8[%c0_21, %c0_22, %c0_23, %c0_24], %39 {strides = array<i32>} : memref<1x4x8x8xf32, #tpu.memory_space<vmem>>, vector<1x1x8x8xf32>,
    %40 = vector.extract_strided_slice %27 {offsets = [0, 8], sizes = [8, 8], strides = [1, 1]} : vector<8x96xf32> to vector<8x8xf32>
    %c0_25 = arith.constant 0 : index
    %c1 = arith.constant 1 : index
    %c0_26 = arith.constant 0 : index
    %c0_27 = arith.constant 0 : index
    %41 = vector.load %arg6[%c0_25, %c1, %c0_26, %c0_27] : memref<1x4x8x8xf32, #tpu.memory_space<vmem>>, vector<1x1x8x8xf32>
    %42 = vector.shape_cast %41 : vector<1x1x8x8xf32> to vector<8x8xf32>
    %43 = vector.shape_cast %40 : vector<8x8xf32> to vector<1x1x8x8xf32>
    tpu.vector_store %arg6[%c0_25, %c1, %c0_26, %c0_27], %43 {strides = array<i32>} : memref<1x4x8x8xf32, #tpu.memory_space<vmem>>, vector<1x1x8x8xf32>,
    %44 = vector.extract_strided_slice %27 {offsets = [0, 40], sizes = [8, 8], strides = [1, 1]} : vector<8x96xf32> to vector<8x8xf32>
    %c0_28 = arith.constant 0 : index
    %c1_29 = arith.constant 1 : index
    %c0_30 = arith.constant 0 : index
    %c0_31 = arith.constant 0 : index
    %45 = vector.load %arg7[%c0_28, %c1_29, %c0_30, %c0_31] : memref<1x4x8x8xf32, #tpu.memory_space<vmem>>, vector<1x1x8x8xf32>
    %46 = vector.shape_cast %45 : vector<1x1x8x8xf32> to vector<8x8xf32>
    %47 = vector.shape_cast %44 : vector<8x8xf32> to vector<1x1x8x8xf32>
    tpu.vector_store %arg7[%c0_28, %c1_29, %c0_30, %c0_31], %47 {strides = array<i32>} : memref<1x4x8x8xf32, #tpu.memory_space<vmem>>, vector<1x1x8x8xf32>,
    %48 = vector.extract_strided_slice %27 {offsets = [0, 72], sizes = [8, 8], strides = [1, 1]} : vector<8x96xf32> to vector<8x8xf32>
    %c0_32 = arith.constant 0 : index
    %c1_33 = arith.constant 1 : index
    %c0_34 = arith.constant 0 : index
    %c0_35 = arith.constant 0 : index
    %49 = vector.load %arg8[%c0_32, %c1_33, %c0_34, %c0_35] : memref<1x4x8x8xf32, #tpu.memory_space<vmem>>, vector<1x1x8x8xf32>
    %50 = vector.shape_cast %49 : vector<1x1x8x8xf32> to vector<8x8xf32>
    %51 = vector.shape_cast %48 : vector<8x8xf32> to vector<1x1x8x8xf32>
    tpu.vector_store %arg8[%c0_32, %c1_33, %c0_34, %c0_35], %51 {strides = array<i32>} : memref<1x4x8x8xf32, #tpu.memory_space<vmem>>, vector<1x1x8x8xf32>,
    %52 = vector.extract_strided_slice %27 {offsets = [0, 16], sizes = [8, 8], strides = [1, 1]} : vector<8x96xf32> to vector<8x8xf32>
    %c0_36 = arith.constant 0 : index
    %c2 = arith.constant 2 : index
    %c0_37 = arith.constant 0 : index
    %c0_38 = arith.constant 0 : index
    %53 = vector.load %arg6[%c0_36, %c2, %c0_37, %c0_38] : memref<1x4x8x8xf32, #tpu.memory_space<vmem>>, vector<1x1x8x8xf32>
    %54 = vector.shape_cast %53 : vector<1x1x8x8xf32> to vector<8x8xf32>
    %55 = vector.shape_cast %52 : vector<8x8xf32> to vector<1x1x8x8xf32>
    tpu.vector_store %arg6[%c0_36, %c2, %c0_37, %c0_38], %55 {strides = array<i32>} : memref<1x4x8x8xf32, #tpu.memory_space<vmem>>, vector<1x1x8x8xf32>,
    %56 = vector.extract_strided_slice %27 {offsets = [0, 48], sizes = [8, 8], strides = [1, 1]} : vector<8x96xf32> to vector<8x8xf32>
    %c0_39 = arith.constant 0 : index
    %c2_40 = arith.constant 2 : index
    %c0_41 = arith.constant 0 : index
    %c0_42 = arith.constant 0 : index
    %57 = vector.load %arg7[%c0_39, %c2_40, %c0_41, %c0_42] : memref<1x4x8x8xf32, #tpu.memory_space<vmem>>, vector<1x1x8x8xf32>
    %58 = vector.shape_cast %57 : vector<1x1x8x8xf32> to vector<8x8xf32>
    %59 = vector.shape_cast %56 : vector<8x8xf32> to vector<1x1x8x8xf32>
    tpu.vector_store %arg7[%c0_39, %c2_40, %c0_41, %c0_42], %59 {strides = array<i32>} : memref<1x4x8x8xf32, #tpu.memory_space<vmem>>, vector<1x1x8x8xf32>,
    %60 = vector.extract_strided_slice %27 {offsets = [0, 80], sizes = [8, 8], strides = [1, 1]} : vector<8x96xf32> to vector<8x8xf32>
    %c0_43 = arith.constant 0 : index
    %c2_44 = arith.constant 2 : index
    %c0_45 = arith.constant 0 : index
    %c0_46 = arith.constant 0 : index
    %61 = vector.load %arg8[%c0_43, %c2_44, %c0_45, %c0_46] : memref<1x4x8x8xf32, #tpu.memory_space<vmem>>, vector<1x1x8x8xf32>
    %62 = vector.shape_cast %61 : vector<1x1x8x8xf32> to vector<8x8xf32>
    %63 = vector.shape_cast %60 : vector<8x8xf32> to vector<1x1x8x8xf32>
    tpu.vector_store %arg8[%c0_43, %c2_44, %c0_45, %c0_46], %63 {strides = array<i32>} : memref<1x4x8x8xf32, #tpu.memory_space<vmem>>, vector<1x1x8x8xf32>,
    %64 = vector.extract_strided_slice %27 {offsets = [0, 24], sizes = [8, 8], strides = [1, 1]} : vector<8x96xf32> to vector<8x8xf32>
    %c0_47 = arith.constant 0 : index
    %c3 = arith.constant 3 : index
    %c0_48 = arith.constant 0 : index
    %c0_49 = arith.constant 0 : index
    %65 = vector.load %arg6[%c0_47, %c3, %c0_48, %c0_49] : memref<1x4x8x8xf32, #tpu.memory_space<vmem>>, vector<1x1x8x8xf32>
    %66 = vector.shape_cast %65 : vector<1x1x8x8xf32> to vector<8x8xf32>
    %67 = vector.shape_cast %64 : vector<8x8xf32> to vector<1x1x8x8xf32>
    tpu.vector_store %arg6[%c0_47, %c3, %c0_48, %c0_49], %67 {strides = array<i32>} : memref<1x4x8x8xf32, #tpu.memory_space<vmem>>, vector<1x1x8x8xf32>,
    %68 = vector.extract_strided_slice %27 {offsets = [0, 56], sizes = [8, 8], strides = [1, 1]} : vector<8x96xf32> to vector<8x8xf32>
    %c0_50 = arith.constant 0 : index
    %c3_51 = arith.constant 3 : index
    %c0_52 = arith.constant 0 : index
    %c0_53 = arith.constant 0 : index
    %69 = vector.load %arg7[%c0_50, %c3_51, %c0_52, %c0_53] : memref<1x4x8x8xf32, #tpu.memory_space<vmem>>, vector<1x1x8x8xf32>
    %70 = vector.shape_cast %69 : vector<1x1x8x8xf32> to vector<8x8xf32>
    %71 = vector.shape_cast %68 : vector<8x8xf32> to vector<1x1x8x8xf32>
    tpu.vector_store %arg7[%c0_50, %c3_51, %c0_52, %c0_53], %71 {strides = array<i32>} : memref<1x4x8x8xf32, #tpu.memory_space<vmem>>, vector<1x1x8x8xf32>,
    %72 = vector.extract_strided_slice %27 {offsets = [0, 88], sizes = [8, 8], strides = [1, 1]} : vector<8x96xf32> to vector<8x8xf32>
    %c0_54 = arith.constant 0 : index
    %c3_55 = arith.constant 3 : index
    %c0_56 = arith.constant 0 : index
    %c0_57 = arith.constant 0 : index
    %73 = vector.load %arg8[%c0_54, %c3_55, %c0_56, %c0_57] : memref<1x4x8x8xf32, #tpu.memory_space<vmem>>, vector<1x1x8x8xf32>
    %74 = vector.shape_cast %73 : vector<1x1x8x8xf32> to vector<8x8xf32>
    %75 = vector.shape_cast %72 : vector<8x8xf32> to vector<1x1x8x8xf32>
    tpu.vector_store %arg8[%c0_54, %c3_55, %c0_56, %c0_57], %75 {strides = array<i32>} : memref<1x4x8x8xf32, #tpu.memory_space<vmem>>, vector<1x1x8x8xf32>,
    return
  }
  func.func @transform_0(%arg0: i32, %arg1: i32) -> (i32, i32, i32) {
    %c0_i32 = arith.constant 0 : i32
    %c0_i32_0 = arith.constant 0 : i32
    return %arg0, %arg1, %c0_i32 : i32, i32, i32
  }
  func.func @transform_1(%arg0: i32, %arg1: i32) -> (i32, i32) {
    %c0_i32 = arith.constant 0 : i32
    %c0_i32_0 = arith.constant 0 : i32
    %c0_i32_1 = arith.constant 0 : i32
    return %c0_i32, %c0_i32_0 : i32, i32
  }
  func.func @transform_2(%arg0: i32, %arg1: i32) -> (i32, i32) {
    %c0_i32 = arith.constant 0 : i32
    %c0_i32_0 = arith.constant 0 : i32
    %c0_i32_1 = arith.constant 0 : i32
    return %c0_i32, %c0_i32_0 : i32, i32
  }
  func.func @transform_3(%arg0: i32, %arg1: i32) -> (i32, i32) {
    %c0_i32 = arith.constant 0 : i32
    %c0_i32_0 = arith.constant 0 : i32
    %c0_i32_1 = arith.constant 0 : i32
    return %c0_i32, %c0_i32_0 : i32, i32
  }
  func.func @transform_4(%arg0: i32, %arg1: i32) -> (i32, i32, i32, i32) {
    %c0_i32 = arith.constant 0 : i32
    %c0_i32_0 = arith.constant 0 : i32
    %c0_i32_1 = arith.constant 0 : i32
    return %arg0, %c0_i32, %arg1, %c0_i32_0 : i32, i32, i32, i32
  }
  func.func @transform_5(%arg0: i32, %arg1: i32) -> (i32, i32, i32, i32) {
    %c0_i32 = arith.constant 0 : i32
    %c0_i32_0 = arith.constant 0 : i32
    %c0_i32_1 = arith.constant 0 : i32
    return %arg0, %c0_i32, %arg1, %c0_i32_0 : i32, i32, i32, i32
  }
  func.func @transform_6(%arg0: i32, %arg1: i32) -> (i32, i32, i32, i32) {
    %c0_i32 = arith.constant 0 : i32
    %c0_i32_0 = arith.constant 0 : i32
    %c0_i32_1 = arith.constant 0 : i32
    return %arg0, %c0_i32, %arg1, %c0_i32_0 : i32, i32, i32, i32
  }
}

module attributes {stable_mosaic.version = 11 : i64} {
  func.func @_ln_qkv_kernel(%arg0: i32, %arg1: i32, %arg2: memref<1x8x32xf32, #tpu.memory_space<vmem>>, %arg3: memref<1x32xf32, #tpu.memory_space<vmem>>, %arg4: memref<1x32xf32, #tpu.memory_space<vmem>>, %arg5: memref<32x96xf32, #tpu.memory_space<vmem>>, %arg6: memref<1x4x8x8xf32, #tpu.memory_space<vmem>>, %arg7: memref<1x4x8x8xf32, #tpu.memory_space<vmem>>, %arg8: memref<1x4x8x8xf32, #tpu.memory_space<vmem>>) attributes {dimension_semantics = [#tpu.dimension_semantics<parallel>, #tpu.dimension_semantics<parallel>], iteration_bounds = array<i64: 2, 1>, scalar_prefetch = 0 : i64, scratch_operands = 0 : i64, tpu.core_type = #tpu.core_type<tc>, window_params = [{transform_indices = @transform_0, window_bounds = array<i64: 1, 8, 32>}, {pipeline_mode = #tpu.pipeline_mode<synchronous>, transform_indices = @transform_1, window_bounds = array<i64: 1, 32>}, {pipeline_mode = #tpu.pipeline_mode<synchronous>, transform_indices = @transform_2, window_bounds = array<i64: 1, 32>}, {pipeline_mode = #tpu.pipeline_mode<synchronous>, transform_indices = @transform_3, window_bounds = array<i64: 32, 96>}, {transform_indices = @transform_4, window_bounds = array<i64: 1, 4, 8, 8>}, {transform_indices = @transform_5, window_bounds = array<i64: 1, 4, 8, 8>}, {transform_indices = @transform_6, window_bounds = array<i64: 1, 4, 8, 8>}]} {
    %c0 = arith.constant 0 : index
    %c0_0 = arith.constant 0 : index
    %c0_1 = arith.constant 0 : index
    %0 = vector.load %arg2[%c0, %c0_0, %c0_1] : memref<1x8x32xf32, #tpu.memory_space<vmem>>, vector<1x8x32xf32>
    %1 = vector.shape_cast %0 : vector<1x8x32xf32> to vector<8x32xf32>
    %cst = arith.constant dense<0.000000e+00> : vector<8xf32>
    %2 = vector.multi_reduction <add>, %1, %cst [1] : vector<8x32xf32> to vector<8xf32>
    %3 = vector.shape_cast %2 : vector<8xf32> to vector<8x1xf32>
    %cst_2 = arith.constant 3.200000e+01 : f32
    %4 = vector.broadcast %cst_2 : f32 to vector<8x1xf32>
    %5 = arith.divf %3, %4 : vector<8x1xf32>
    %6 = vector.broadcast %5 : vector<8x1xf32> to vector<8x32xf32>
    %7 = arith.subf %1, %6 : vector<8x32xf32>
    %8 = arith.mulf %7, %7 : vector<8x32xf32>
    %cst_3 = arith.constant dense<0.000000e+00> : vector<8xf32>
    %9 = vector.multi_reduction <add>, %8, %cst_3 [1] : vector<8x32xf32> to vector<8xf32>
    %10 = vector.shape_cast %9 : vector<8xf32> to vector<8x1xf32>
    %cst_4 = arith.constant 3.200000e+01 : f32
    %11 = vector.broadcast %cst_4 : f32 to vector<8x1xf32>
    %12 = arith.divf %10, %11 : vector<8x1xf32>
    %13 = vector.broadcast %5 : vector<8x1xf32> to vector<8x32xf32>
    %14 = arith.subf %1, %13 : vector<8x32xf32>
    %cst_5 = arith.constant 9.99999974E-6 : f32
    %15 = vector.broadcast %cst_5 : f32 to vector<8x1xf32>
    %16 = arith.addf %12, %15 : vector<8x1xf32>
    %17 = math.rsqrt %16 : vector<8x1xf32>
    %18 = vector.broadcast %17 : vector<8x1xf32> to vector<8x32xf32>
    %19 = arith.mulf %14, %18 : vector<8x32xf32>
    %c0_6 = arith.constant 0 : index
    %c0_7 = arith.constant 0 : index
    %20 = vector.load %arg3[%c0_6, %c0_7] : memref<1x32xf32, #tpu.memory_space<vmem>>, vector<1x32xf32>
    %21 = vector.broadcast %20 : vector<1x32xf32> to vector<8x32xf32>
    %22 = arith.mulf %19, %21 : vector<8x32xf32>
    %c0_8 = arith.constant 0 : index
    %c0_9 = arith.constant 0 : index
    %23 = vector.load %arg4[%c0_8, %c0_9] : memref<1x32xf32, #tpu.memory_space<vmem>>, vector<1x32xf32>
    %24 = vector.broadcast %23 : vector<1x32xf32> to vector<8x32xf32>
    %25 = arith.addf %22, %24 : vector<8x32xf32>
    %c0_10 = arith.constant 0 : index
    %c0_11 = arith.constant 0 : index
    %26 = vector.load %arg5[%c0_10, %c0_11] : memref<32x96xf32, #tpu.memory_space<vmem>>, vector<32x96xf32>
    %cst_12 = arith.constant dense<0.000000e+00> : vector<8x96xf32>
    %27 = tpu.matmul %25, %26, %cst_12 {dimension_numbers = #tpu.dot_dimension_numbers<[1], [0], [0], [1], [0, 0, 1, 1], [], []>} : vector<8x32xf32>, vector<32x96xf32>, vector<8x96xf32> -> vector<8x96xf32>
    %28 = vector.extract_strided_slice %27 {offsets = [0, 0], sizes = [8, 8], strides = [1, 1]} : vector<8x96xf32> to vector<8x8xf32>
    %c0_13 = arith.constant 0 : index
    %c0_14 = arith.constant 0 : index
    %c0_15 = arith.constant 0 : index
    %c0_16 = arith.constant 0 : index
    %29 = vector.load %arg6[%c0_13, %c0_14, %c0_15, %c0_16] : memref<1x4x8x8xf32, #tpu.memory_space<vmem>>, vector<1x1x8x8xf32>
    %30 = vector.shape_cast %29 : vector<1x1x8x8xf32> to vector<8x8xf32>
    %31 = vector.shape_cast %28 : vector<8x8xf32> to vector<1x1x8x8xf32>
    tpu.vector_store %arg6[%c0_13, %c0_14, %c0_15, %c0_16], %31 {strides = array<i32>} : memref<1x4x8x8xf32, #tpu.memory_space<vmem>>, vector<1x1x8x8xf32>,
    %32 = vector.extract_strided_slice %27 {offsets = [0, 32], sizes = [8, 8], strides = [1, 1]} : vector<8x96xf32> to vector<8x8xf32>
    %c0_17 = arith.constant 0 : index
    %c0_18 = arith.constant 0 : index
    %c0_19 = arith.constant 0 : index
    %c0_20 = arith.constant 0 : index
    %33 = vector.load %arg7[%c0_17, %c0_18, %c0_19, %c0_20] : memref<1x4x8x8xf32, #tpu.memory_space<vmem>>, vector<1x1x8x8xf32>
    %34 = vector.shape_cast %33 : vector<1x1x8x8xf32> to vector<8x8xf32>
    %35 = vector.shape_cast %32 : vector<8x8xf32> to vector<1x1x8x8xf32>
    tpu.vector_store %arg7[%c0_17, %c0_18, %c0_19, %c0_20], %35 {strides = array<i32>} : memref<1x4x8x8xf32, #tpu.memory_space<vmem>>, vector<1x1x8x8xf32>,
    %36 = vector.extract_strided_slice %27 {offsets = [0, 64], sizes = [8, 8], strides = [1, 1]} : vector<8x96xf32> to vector<8x8xf32>
    %c0_21 = arith.constant 0 : index
    %c0_22 = arith.constant 0 : index
    %c0_23 = arith.constant 0 : index
    %c0_24 = arith.constant 0 : index
    %37 = vector.load %arg8[%c0_21, %c0_22, %c0_23, %c0_24] : memref<1x4x8x8xf32, #tpu.memory_space<vmem>>, vector<1x1x8x8xf32>
    %38 = vector.shape_cast %37 : vector<1x1x8x8xf32> to vector<8x8xf32>
    %39 = vector.shape_cast %36 : vector<8x8xf32> to vector<1x1x8x8xf32>
    tpu.vector_store %arg8[%c0_21, %c0_22, %c0_23, %c0_24], %39 {strides = array<i32>} : memref<1x4x8x8xf32, #tpu.memory_space<vmem>>, vector<1x1x8x8xf32>,
    %40 = vector.extract_strided_slice %27 {offsets = [0, 8], sizes = [8, 8], strides = [1, 1]} : vector<8x96xf32> to vector<8x8xf32>
    %c0_25 = arith.constant 0 : index
    %c1 = arith.constant 1 : index
    %c0_26 = arith.constant 0 : index
    %c0_27 = arith.constant 0 : index
    %41 = vector.load %arg6[%c0_25, %c1, %c0_26, %c0_27] : memref<1x4x8x8xf32, #tpu.memory_space<vmem>>, vector<1x1x8x8xf32>
    %42 = vector.shape_cast %41 : vector<1x1x8x8xf32> to vector<8x8xf32>
    %43 = vector.shape_cast %40 : vector<8x8xf32> to vector<1x1x8x8xf32>
    tpu.vector_store %arg6[%c0_25, %c1, %c0_26, %c0_27], %43 {strides = array<i32>} : memref<1x4x8x8xf32, #tpu.memory_space<vmem>>, vector<1x1x8x8xf32>,
    %44 = vector.extract_strided_slice %27 {offsets = [0, 40], sizes = [8, 8], strides = [1, 1]} : vector<8x96xf32> to vector<8x8xf32>
    %c0_28 = arith.constant 0 : index
    %c1_29 = arith.constant 1 : index
    %c0_30 = arith.constant 0 : index
    %c0_31 = arith.constant 0 : index
    %45 = vector.load %arg7[%c0_28, %c1_29, %c0_30, %c0_31] : memref<1x4x8x8xf32, #tpu.memory_space<vmem>>, vector<1x1x8x8xf32>
    %46 = vector.shape_cast %45 : vector<1x1x8x8xf32> to vector<8x8xf32>
    %47 = vector.shape_cast %44 : vector<8x8xf32> to vector<1x1x8x8xf32>
    tpu.vector_store %arg7[%c0_28, %c1_29, %c0_30, %c0_31], %47 {strides = array<i32>} : memref<1x4x8x8xf32, #tpu.memory_space<vmem>>, vector<1x1x8x8xf32>,
    %48 = vector.extract_strided_slice %27 {offsets = [0, 72], sizes = [8, 8], strides = [1, 1]} : vector<8x96xf32> to vector<8x8xf32>
    %c0_32 = arith.constant 0 : index
    %c1_33 = arith.constant 1 : index
    %c0_34 = arith.constant 0 : index
    %c0_35 = arith.constant 0 : index
    %49 = vector.load %arg8[%c0_32, %c1_33, %c0_34, %c0_35] : memref<1x4x8x8xf32, #tpu.memory_space<vmem>>, vector<1x1x8x8xf32>
    %50 = vector.shape_cast %49 : vector<1x1x8x8xf32> to vector<8x8xf32>
    %51 = vector.shape_cast %48 : vector<8x8xf32> to vector<1x1x8x8xf32>
    tpu.vector_store %arg8[%c0_32, %c1_33, %c0_34, %c0_35], %51 {strides = array<i32>} : memref<1x4x8x8xf32, #tpu.memory_space<vmem>>, vector<1x1x8x8xf32>,
    %52 = vector.extract_strided_slice %27 {offsets = [0, 16], sizes = [8, 8], strides = [1, 1]} : vector<8x96xf32> to vector<8x8xf32>
    %c0_36 = arith.constant 0 : index
    %c2 = arith.constant 2 : index
    %c0_37 = arith.constant 0 : index
    %c0_38 = arith.constant 0 : index
    %53 = vector.load %arg6[%c0_36, %c2, %c0_37, %c0_38] : memref<1x4x8x8xf32, #tpu.memory_space<vmem>>, vector<1x1x8x8xf32>
    %54 = vector.shape_cast %53 : vector<1x1x8x8xf32> to vector<8x8xf32>
    %55 = vector.shape_cast %52 : vector<8x8xf32> to vector<1x1x8x8xf32>
    tpu.vector_store %arg6[%c0_36, %c2, %c0_37, %c0_38], %55 {strides = array<i32>} : memref<1x4x8x8xf32, #tpu.memory_space<vmem>>, vector<1x1x8x8xf32>,
    %56 = vector.extract_strided_slice %27 {offsets = [0, 48], sizes = [8, 8], strides = [1, 1]} : vector<8x96xf32> to vector<8x8xf32>
    %c0_39 = arith.constant 0 : index
    %c2_40 = arith.constant 2 : index
    %c0_41 = arith.constant 0 : index
    %c0_42 = arith.constant 0 : index
    %57 = vector.load %arg7[%c0_39, %c2_40, %c0_41, %c0_42] : memref<1x4x8x8xf32, #tpu.memory_space<vmem>>, vector<1x1x8x8xf32>
    %58 = vector.shape_cast %57 : vector<1x1x8x8xf32> to vector<8x8xf32>
    %59 = vector.shape_cast %56 : vector<8x8xf32> to vector<1x1x8x8xf32>
    tpu.vector_store %arg7[%c0_39, %c2_40, %c0_41, %c0_42], %59 {strides = array<i32>} : memref<1x4x8x8xf32, #tpu.memory_space<vmem>>, vector<1x1x8x8xf32>,
    %60 = vector.extract_strided_slice %27 {offsets = [0, 80], sizes = [8, 8], strides = [1, 1]} : vector<8x96xf32> to vector<8x8xf32>
    %c0_43 = arith.constant 0 : index
    %c2_44 = arith.constant 2 : index
    %c0_45 = arith.constant 0 : index
    %c0_46 = arith.constant 0 : index
    %61 = vector.load %arg8[%c0_43, %c2_44, %c0_45, %c0_46] : memref<1x4x8x8xf32, #tpu.memory_space<vmem>>, vector<1x1x8x8xf32>
    %62 = vector.shape_cast %61 : vector<1x1x8x8xf32> to vector<8x8xf32>
    %63 = vector.shape_cast %60 : vector<8x8xf32> to vector<1x1x8x8xf32>
    tpu.vector_store %arg8[%c0_43, %c2_44, %c0_45, %c0_46], %63 {strides = array<i32>} : memref<1x4x8x8xf32, #tpu.memory_space<vmem>>, vector<1x1x8x8xf32>,
    %64 = vector.extract_strided_slice %27 {offsets = [0, 24], sizes = [8, 8], strides = [1, 1]} : vector<8x96xf32> to vector<8x8xf32>
    %c0_47 = arith.constant 0 : index
    %c3 = arith.constant 3 : index
    %c0_48 = arith.constant 0 : index
    %c0_49 = arith.constant 0 : index
    %65 = vector.load %arg6[%c0_47, %c3, %c0_48, %c0_49] : memref<1x4x8x8xf32, #tpu.memory_space<vmem>>, vector<1x1x8x8xf32>
    %66 = vector.shape_cast %65 : vector<1x1x8x8xf32> to vector<8x8xf32>
    %67 = vector.shape_cast %64 : vector<8x8xf32> to vector<1x1x8x8xf32>
    tpu.vector_store %arg6[%c0_47, %c3, %c0_48, %c0_49], %67 {strides = array<i32>} : memref<1x4x8x8xf32, #tpu.memory_space<vmem>>, vector<1x1x8x8xf32>,
    %68 = vector.extract_strided_slice %27 {offsets = [0, 56], sizes = [8, 8], strides = [1, 1]} : vector<8x96xf32> to vector<8x8xf32>
    %c0_50 = arith.constant 0 : index
    %c3_51 = arith.constant 3 : index
    %c0_52 = arith.constant 0 : index
    %c0_53 = arith.constant 0 : index
    %69 = vector.load %arg7[%c0_50, %c3_51, %c0_52, %c0_53] : memref<1x4x8x8xf32, #tpu.memory_space<vmem>>, vector<1x1x8x8xf32>
    %70 = vector.shape_cast %69 : vector<1x1x8x8xf32> to vector<8x8xf32>
    %71 = vector.shape_cast %68 : vector<8x8xf32> to vector<1x1x8x8xf32>
    tpu.vector_store %arg7[%c0_50, %c3_51, %c0_52, %c0_53], %71 {strides = array<i32>} : memref<1x4x8x8xf32, #tpu.memory_space<vmem>>, vector<1x1x8x8xf32>,
    %72 = vector.extract_strided_slice %27 {offsets = [0, 88], sizes = [8, 8], strides = [1, 1]} : vector<8x96xf32> to vector<8x8xf32>
    %c0_54 = arith.constant 0 : index
    %c3_55 = arith.constant 3 : index
    %c0_56 = arith.constant 0 : index
    %c0_57 = arith.constant 0 : index
    %73 = vector.load %arg8[%c0_54, %c3_55, %c0_56, %c0_57] : memref<1x4x8x8xf32, #tpu.memory_space<vmem>>, vector<1x1x8x8xf32>
    %74 = vector.shape_cast %73 : vector<1x1x8x8xf32> to vector<8x8xf32>
    %75 = vector.shape_cast %72 : vector<8x8xf32> to vector<1x1x8x8xf32>
    tpu.vector_store %arg8[%c0_54, %c3_55, %c0_56, %c0_57], %75 {strides = array<i32>} : memref<1x4x8x8xf32, #tpu.memory_space<vmem>>, vector<1x1x8x8xf32>,
    return
  }
  func.func @transform_0(%arg0: i32, %arg1: i32) -> (i32, i32, i32) {
    %c0_i32 = arith.constant 0 : i32
    %c0_i32_0 = arith.constant 0 : i32
    return %arg0, %arg1, %c0_i32 : i32, i32, i32
  }
  func.func @transform_1(%arg0: i32, %arg1: i32) -> (i32, i32) {
    %c0_i32 = arith.constant 0 : i32
    %c0_i32_0 = arith.constant 0 : i32
    %c0_i32_1 = arith.constant 0 : i32
    return %c0_i32, %c0_i32_0 : i32, i32
  }
  func.func @transform_2(%arg0: i32, %arg1: i32) -> (i32, i32) {
    %c0_i32 = arith.constant 0 : i32
    %c0_i32_0 = arith.constant 0 : i32
    %c0_i32_1 = arith.constant 0 : i32
    return %c0_i32, %c0_i32_0 : i32, i32
  }
  func.func @transform_3(%arg0: i32, %arg1: i32) -> (i32, i32) {
    %c0_i32 = arith.constant 0 : i32
    %c0_i32_0 = arith.constant 0 : i32
    %c0_i32_1 = arith.constant 0 : i32
    return %c0_i32, %c0_i32_0 : i32, i32
  }
  func.func @transform_4(%arg0: i32, %arg1: i32) -> (i32, i32, i32, i32) {
    %c0_i32 = arith.constant 0 : i32
    %c0_i32_0 = arith.constant 0 : i32
    %c0_i32_1 = arith.constant 0 : i32
    return %arg0, %c0_i32, %arg1, %c0_i32_0 : i32, i32, i32, i32
  }
  func.func @transform_5(%arg0: i32, %arg1: i32) -> (i32, i32, i32, i32) {
    %c0_i32 = arith.constant 0 : i32
    %c0_i32_0 = arith.constant 0 : i32
    %c0_i32_1 = arith.constant 0 : i32
    return %arg0, %c0_i32, %arg1, %c0_i32_0 : i32, i32, i32, i32
  }
  func.func @transform_6(%arg0: i32, %arg1: i32) -> (i32, i32, i32, i32) {
    %c0_i32 = arith.constant 0 : i32
    %c0_i32_0 = arith.constant 0 : i32
    %c0_i32_1 = arith.constant 0 : i32
    return %arg0, %c0_i32, %arg1, %c0_i32_0 : i32, i32, i32, i32
  }
}

</mosaic_0001>

<llo_original>
// kernel: tpu_custom_call.1
$region0: #{tpu_custom_call.1}
  #allocation0 [shape = 'u32[]', space=smem, size = 0x4, offset = 0x4, fixed_abs, tag = 'smem constant byte address 0x4 - core index']
  #allocation1 [shape = 'u32[72,128]{1,0:T(1,128)}', space=vmem, size = 0x9000, scoped, tag = 'internal scratch']
  %s0 = inlined_call_operand.hbm [shape: f32[2,8,32], index: 0, kind: input, shape index: {}]
  %s1 = inlined_call_operand.hbm [shape: f32[1,32], index: 1, kind: input, shape index: {}]
  %s2 = inlined_call_operand.vmem [shape: f32[1,32], index: 2, kind: input, shape index: {}]
  %s3 = inlined_call_operand.hbm [shape: f32[32,96], index: 3, kind: input, shape index: {}]
  %s4 = inlined_call_operand.hbm [shape: f32[2,4,8,8], index: 4, kind: output, shape index: {0}]
  %s5 = inlined_call_operand.hbm [shape: f32[2,4,8,8], index: 5, kind: output, shape index: {1}]
  %s6 = inlined_call_operand.hbm [shape: f32[2,4,8,8], index: 6, kind: output, shape index: {2}]
  %7 = xla_tuple %s4, %s5, %s6
  %s8 = sld [smem:[#allocation0]]
  $region77: #{tpu_custom_call.1} parent=0
    _
  %s10 = ssub.s32 1, %s8
  %s11 = scalar_select 0, %s10, %s8
  $region1: #{tpu_custom_call.1} parent=0
    #allocation2 [shape = 'u8[8192]{0}', space=vmem, size = 0x2000, scoped, tag = 'input window, operand 0']
    #allocation3 [shape = 's32[2]{0}', space=sflag, size = 0x8, scoped, tag = 'scoped memory for tpu_custom_call.1']
    #allocation4 [shape = 's32[2]{0}', space=sflag, size = 0x8, scoped, tag = 'scoped memory for tpu_custom_call.1']
    #allocation5 [shape = 'u8[512]{0}', space=vmem, size = 0x400, scoped, tag = 'input window, operand 1, single buffered']
    #allocation6 [shape = 's32[1]{0}', space=sflag, size = 0x4, scoped, tag = 'scoped memory for tpu_custom_call.1']
    #allocation7 [shape = 'u8[16384]{0}', space=vmem, size = 0x4000, scoped, tag = 'input window, operand 3, single buffered']
    #allocation8 [shape = 'u8[32768]{0}', space=vmem, size = 0x8000, scoped, tag = 'output window, operand 0']
    #allocation9 [shape = 'u8[32768]{0}', space=vmem, size = 0x8000, scoped, tag = 'output window, operand 1']
    #allocation10 [shape = 's32[2]{0}', space=sflag, size = 0x8, scoped, tag = 'scoped memory for tpu_custom_call.1']
    #allocation11 [shape = 'u8[32768]{0}', space=vmem, size = 0x8000, scoped, tag = 'output window, operand 2']
    %12 = vsyncpa [#allocation3], 0
    %s13 = scalar_lea.sflag [#allocation3], 1
    %14 = vsyncpa %s13, 0
    %15 = vsyncpa [#allocation6], 0
    %16 = vsyncpa [#allocation4], 0
    %s17 = scalar_lea.sflag [#allocation4], 1
    %18 = vsyncpa %s17, 0
    %19 = vsyncpa [#allocation10], 0
    %s20 = scalar_lea.sflag [#allocation10], 1
    %21 = vsyncpa %s20, 0
    loop: start=0, step=1, limit=4
    $region2: #{tpu_custom_call.1} parent=1 // loop_pre_header
      _
    $region3: #{tpu_custom_call.1} parent=1 // loop_header
      %s23 = sphi 0, %s27
      %p24 = scmp.ge.s32.totalorder %s23, 4
      %s30 = sphi 0, %s42
      %s31 = sphi 0, %s38
      %s32 = sphi 0, %s30
      %s33 = sphi 0, %s31
      %s34 = sphi 0, %s32
      %s35 = sphi 0, %s33
      %s47 = sphi 0, %s49
      %s50 = sphi 0, %s47
      %s51 = sphi 0, %s50
      %s67 = sphi 0, %s51
      %s71 = sphi 0, %s71
      %s73 = sphi 0, %s71
      %s74 = sphi 0, %s73
      %s88 = sphi 0, %s74
      %s92 = sphi 0, %s92
      %s94 = sphi 0, %s92
      %s95 = sphi 0, %s94
      %s109 = sphi 0, %s95
      %s113 = sphi 0, %s113
      %s115 = sphi 0, %s113
      %s116 = sphi 0, %s115
      %s130 = sphi 0, %s116
      %s138 = sphi 0, %s140
      %s141 = sphi 0, %s138
      %s142 = sphi 0, %s141
      %s158 = sphi 0, %s142
      %s166 = sphi 0, %s168
      %s169 = sphi 0, %s166
      %s170 = sphi 0, %s169
      %s186 = sphi 0, %s170
      %s194 = sphi 0, %s196
      %s197 = sphi 0, %s194
      %s198 = sphi 0, %s197
      %s214 = sphi 0, %s198
    $region4: #{tpu_custom_call.1} parent=1 // loop_header_branch
      %26 = sbr.rel (%p24) target = $region8
    $region5: #{tpu_custom_call.1} parent=1 // loop_body
      %s28 = ssub.s32 %s23, 1
      %s29 = ssub.s32 %s23, 2
      %s36 = sadd.s32 1, %s31
      %p37 = scmp.ge.s32.totalorder %s36, 1
      %s38 = scalar_select %p37, 0, %s36
      %s39 = sadd.s32 1, %s30
      %s40 = scalar_select %p37, %s39, %s30
      %p41 = scmp.ge.s32.totalorder %s40, 2
      %s42 = scalar_select %p41, 0, %s40
      %s43 = ssub.s32 %s30, %s42
      %s44 = ssub.s32 %s31, %s38
      %s45 = sor.u32 %s43, %s44
      %p46 = scmp.eq.s32.totalorder %s45, 0
      %s48 = sadd.s32 %s47, 1
      %s49 = scalar_select %p46, %s47, %s48
      %p52 = pneg %p46
      %p53 = scmp.eq.s32.totalorder %s23, 1
      %p54 = por %p52, %p53
      %p55 = scmp.ne.s32.totalorder %s47, %s50
      %p56 = scmp.eq.s32.totalorder %s23, 0
      %p57 = por %p55, %p56
      %p58 = scmp.ne.s32.totalorder %s47, %s50
      %p59 = scmp.eq.s32.totalorder %s28, 1
      %p60 = por %p58, %p59
      %p61 = scmp.ne.s32.totalorder %s50, %s51
      %p62 = scmp.eq.s32.totalorder %s28, 0
      %p63 = por %p61, %p62
      %p64 = scmp.ne.s32.totalorder %s50, %s51
      %p65 = scmp.eq.s32.totalorder %s29, 1
      %p66 = por %p64, %p65
      %p68 = scmp.ne.s32.totalorder %s51, %s67
      %p69 = scmp.eq.s32.totalorder %s29, 0
      %p70 = por %p68, %p69
      %s72 = sadd.s32 %s71, 1
      %p75 = scmp.eq.s32.totalorder %s23, 1
      %p76 = scmp.ne.s32.totalorder %s71, %s73
      %p77 = scmp.eq.s32.totalorder %s23, 0
      %p78 = por %p76, %p77
      %p79 = scmp.ne.s32.totalorder %s71, %s73
      %p80 = scmp.eq.s32.totalorder %s28, 1
      %p81 = por %p79, %p80
      %p82 = scmp.ne.s32.totalorder %s73, %s74
      %p83 = scmp.eq.s32.totalorder %s28, 0
      %p84 = por %p82, %p83
      %p85 = scmp.ne.s32.totalorder %s73, %s74
      %p86 = scmp.eq.s32.totalorder %s29, 1
      %p87 = por %p85, %p86
      %p89 = scmp.ne.s32.totalorder %s74, %s88
      %p90 = scmp.eq.s32.totalorder %s29, 0
      %p91 = por %p89, %p90
      %s93 = sadd.s32 %s92, 1
      %p96 = scmp.eq.s32.totalorder %s23, 1
      %p97 = scmp.ne.s32.totalorder %s92, %s94
      %p98 = scmp.eq.s32.totalorder %s23, 0
      %p99 = por %p97, %p98
      %p100 = scmp.ne.s32.totalorder %s92, %s94
      %p101 = scmp.eq.s32.totalorder %s28, 1
      %p102 = por %p100, %p101
      %p103 = scmp.ne.s32.totalorder %s94, %s95
      %p104 = scmp.eq.s32.totalorder %s28, 0
      %p105 = por %p103, %p104
      %p106 = scmp.ne.s32.totalorder %s94, %s95
      %p107 = scmp.eq.s32.totalorder %s29, 1
      %p108 = por %p106, %p107
      %p110 = scmp.ne.s32.totalorder %s95, %s109
      %p111 = scmp.eq.s32.totalorder %s29, 0
      %p112 = por %p110, %p111
      %s114 = sadd.s32 %s113, 1
      %p117 = scmp.eq.s32.totalorder %s23, 1
      %p118 = scmp.ne.s32.totalorder %s113, %s115
      %p119 = scmp.eq.s32.totalorder %s23, 0
      %p120 = por %p118, %p119
      %p121 = scmp.ne.s32.totalorder %s113, %s115
      %p122 = scmp.eq.s32.totalorder %s28, 1
      %p123 = por %p121, %p122
      %p124 = scmp.ne.s32.totalorder %s115, %s116
      %p125 = scmp.eq.s32.totalorder %s28, 0
      %p126 = por %p124, %p125
      %p127 = scmp.ne.s32.totalorder %s115, %s116
      %p128 = scmp.eq.s32.totalorder %s29, 1
      %p129 = por %p127, %p128
      %p131 = scmp.ne.s32.totalorder %s116, %s130
      %p132 = scmp.eq.s32.totalorder %s29, 0
      %p133 = por %p131, %p132
      %s134 = ssub.s32 %s30, %s42
      %s135 = ssub.s32 %s31, %s38
      %s136 = sor.u32 %s134, %s135
      %p137 = scmp.eq.s32.totalorder %s136, 0
      %s139 = sadd.s32 %s138, 1
      %s140 = scalar_select %p137, %s138, %s139
      %p143 = pneg %p137
      %p144 = scmp.eq.s32.totalorder %s23, 1
      %p145 = por %p143, %p144
      %p146 = scmp.ne.s32.totalorder %s138, %s141
      %p147 = scmp.eq.s32.totalorder %s23, 0
      %p148 = por %p146, %p147
      %p149 = scmp.ne.s32.totalorder %s138, %s141
      %p150 = scmp.eq.s32.totalorder %s28, 1
      %p151 = por %p149, %p150
      %p152 = scmp.ne.s32.totalorder %s141, %s142
      %p153 = scmp.eq.s32.totalorder %s28, 0
      %p154 = por %p152, %p153
      %p155 = scmp.ne.s32.totalorder %s141, %s142
      %p156 = scmp.eq.s32.totalorder %s29, 1
      %p157 = por %p155, %p156
      %p159 = scmp.ne.s32.totalorder %s142, %s158
      %p160 = scmp.eq.s32.totalorder %s29, 0
      %p161 = por %p159, %p160
      %s162 = ssub.s32 %s30, %s42
      %s163 = ssub.s32 %s31, %s38
      %s164 = sor.u32 %s162, %s163
      %p165 = scmp.eq.s32.totalorder %s164, 0
      %s167 = sadd.s32 %s166, 1
      %s168 = scalar_select %p165, %s166, %s167
      %p171 = pneg %p165
      %p172 = scmp.eq.s32.totalorder %s23, 1
      %p173 = por %p171, %p172
      %p174 = scmp.ne.s32.totalorder %s166, %s169
      %p175 = scmp.eq.s32.totalorder %s23, 0
      %p176 = por %p174, %p175
      %p177 = scmp.ne.s32.totalorder %s166, %s169
      %p178 = scmp.eq.s32.totalorder %s28, 1
      %p179 = por %p177, %p178
      %p180 = scmp.ne.s32.totalorder %s169, %s170
      %p181 = scmp.eq.s32.totalorder %s28, 0
      %p182 = por %p180, %p181
      %p183 = scmp.ne.s32.totalorder %s169, %s170
      %p184 = scmp.eq.s32.totalorder %s29, 1
      %p185 = por %p183, %p184
      %p187 = scmp.ne.s32.totalorder %s170, %s186
      %p188 = scmp.eq.s32.totalorder %s29, 0
      %p189 = por %p187, %p188
      %s190 = ssub.s32 %s30, %s42
      %s191 = ssub.s32 %s31, %s38
      %s192 = sor.u32 %s190, %s191
      %p193 = scmp.eq.s32.totalorder %s192, 0
      %s195 = sadd.s32 %s194, 1
      %s196 = scalar_select %p193, %s194, %s195
      %p199 = pneg %p193
      %p200 = scmp.eq.s32.totalorder %s23, 1
      %p201 = por %p199, %p200
      %p202 = scmp.ne.s32.totalorder %s194, %s197
      %p203 = scmp.eq.s32.totalorder %s23, 0
      %p204 = por %p202, %p203
      %p205 = scmp.ne.s32.totalorder %s194, %s197
      %p206 = scmp.eq.s32.totalorder %s28, 1
      %p207 = por %p205, %p206
      %p208 = scmp.ne.s32.totalorder %s197, %s198
      %p209 = scmp.eq.s32.totalorder %s28, 0
      %p210 = por %p208, %p209
      %p211 = scmp.ne.s32.totalorder %s197, %s198
      %p212 = scmp.eq.s32.totalorder %s29, 1
      %p213 = por %p211, %p212
      %p215 = scmp.ne.s32.totalorder %s198, %s214
      %p216 = scmp.eq.s32.totalorder %s29, 0
      %p217 = por %p215, %p216
      %p218 = scmp.le.s32.totalorder 1, %s23
      %p219 = scmp.lt.s32.totalorder %s23, 3
      %p220 = pnand %p218, %p219
      %p221 = pneg %p220
      // Predicated region
      $region9: #{tpu_custom_call.1} parent=5 // pred_check
        _
      $region10: #{tpu_custom_call.1} parent=5 // pred_check_branch
        %223 = sbr.rel (%p220) target = $region12
      $region11: #{tpu_custom_call.1} parent=5 // pred_region
        %s224 = ssub.s32 %s23, 1
        // Predicated region
        $region13: #{tpu_custom_call.1} parent=11 // pred_check
          %p225 = pneg %p84
        $region14: #{tpu_custom_call.1} parent=11 // pred_check_branch
          %227 = sbr.rel (%p225) target = $region16
        $region15: #{tpu_custom_call.1} parent=11 // pred_region
          %229 = vsyncadd [#allocation6], 0
          %s231 = sshll.u32 %s1, 4
          %s232 = int_to_ptr.hbm [resolvable:$true] %s231
          %s233 = sshll.u32 [#allocation5], 4
          %s234 = int_to_ptr.vmem [resolvable:$true] %s233
          %236 = dma.hbm_to_vmem [thread:$0]  %s232, 16, %s234, [#allocation6]
        $region16: #{tpu_custom_call.1} parent=11 // pred_fallthru
          _
        // Predicated region
        $region17: #{tpu_custom_call.1} parent=11 // pred_check
          %p237 = pneg %p105
        $region18: #{tpu_custom_call.1} parent=11 // pred_check_branch
          %239 = sbr.rel (%p237) target = $region20
        $region19: #{tpu_custom_call.1} parent=11 // pred_region
          _
        $region20: #{tpu_custom_call.1} parent=11 // pred_fallthru
          _
        // Predicated region
        $region21: #{tpu_custom_call.1} parent=11 // pred_check
          %p240 = pneg %p126
        $region22: #{tpu_custom_call.1} parent=11 // pred_check_branch
          %242 = sbr.rel (%p240) target = $region24
        $region23: #{tpu_custom_call.1} parent=11 // pred_region
          %244 = vsyncadd [#allocation6], 0
          %s245 = sshll.u32 %s3, 4
          %s246 = int_to_ptr.hbm [resolvable:$true] %s245
          %s247 = sshll.u32 [#allocation7], 4
          %s248 = int_to_ptr.vmem [resolvable:$true] %s247
          %253 = dma.hbm_to_vmem [thread:$0]  %s246, 512, %s248, [#allocation6], 128, 128, 8
        $region24: #{tpu_custom_call.1} parent=11 // pred_fallthru
          _
      $region12: #{tpu_custom_call.1} parent=5 // pred_fallthru
        _
      %p254 = scmp.lt.s32.totalorder %s23, 2
      // Predicated region
      $region25: #{tpu_custom_call.1} parent=5 // pred_check
        %p255 = pneg %p254
      $region26: #{tpu_custom_call.1} parent=5 // pred_check_branch
        %257 = sbr.rel (%p255) target = $region28
      $region27: #{tpu_custom_call.1} parent=5 // pred_region
        // Predicated region
        $region29: #{tpu_custom_call.1} parent=27 // pred_check
          %p258 = pneg %p57
        $region30: #{tpu_custom_call.1} parent=27 // pred_check_branch
          %260 = sbr.rel (%p258) target = $region32
        $region31: #{tpu_custom_call.1} parent=27 // pred_region
          %s261 = sand.u32 %s47, 1
          %s262 = scalar_lea.sflag [#allocation3], %s261
          %s263 = sand.u32 %s47, 1
          %s264 = smul.addr %s263, 8
          %s265 = scalar_lea.vmem [#allocation2], %s264
          %267 = vsyncadd %s262, 0
          %s268 = sadd.s32 %s31, %s30
          %s269 = smul.addr %s268, 8
          %s270 = scalar_lea.hbm %s0, %s269
          %s272 = sshll.u32 %s270, 4
          %s273 = int_to_ptr.hbm [resolvable:$true] %s272
          %s274 = sshll.u32 %s265, 4
          %s275 = int_to_ptr.vmem [resolvable:$true] %s274
          %277 = dma.hbm_to_vmem [thread:$0]  %s273, 128, %s275, %s262
        $region32: #{tpu_custom_call.1} parent=27 // pred_fallthru
          _
      $region28: #{tpu_custom_call.1} parent=5 // pred_fallthru
        _
      %p278 = scmp.le.s32.totalorder 1, %s23
      %p279 = scmp.lt.s32.totalorder %s23, 3
      %p280 = pnand %p278, %p279
      %p281 = pneg %p280
      // Predicated region
      $region33: #{tpu_custom_call.1} parent=5 // pred_check
        _
      $region34: #{tpu_custom_call.1} parent=5 // pred_check_branch
        %283 = sbr.rel (%p280) target = $region36
      $region35: #{tpu_custom_call.1} parent=5 // pred_region
        %s284 = ssub.s32 %s23, 1
        %s285 = sand.u32 %s50, 1
        %s286 = scalar_lea.sflag [#allocation3], %s285
        %s287 = sand.u32 %s50, 1
        %s288 = smul.addr %s287, 8
        %s289 = scalar_lea.vmem [#allocation2], %s288
        // Predicated region
        $region37: #{tpu_custom_call.1} parent=35 // pred_check
          %p290 = pneg %p63
        $region38: #{tpu_custom_call.1} parent=35 // pred_check_branch
          %292 = sbr.rel (%p290) target = $region40
        $region39: #{tpu_custom_call.1} parent=35 // pred_region
          %294 = dma.done %s286, 128
        $region40: #{tpu_custom_call.1} parent=35 // pred_fallthru
          _
        // Predicated region
        $region41: #{tpu_custom_call.1} parent=35 // pred_check
          %p295 = pneg %p84
        $region42: #{tpu_custom_call.1} parent=35 // pred_check_branch
          %297 = sbr.rel (%p295) target = $region44
        $region43: #{tpu_custom_call.1} parent=35 // pred_region
          %299 = dma.done [#allocation6], 16
        $region44: #{tpu_custom_call.1} parent=35 // pred_fallthru
          _
        // Predicated region
        $region45: #{tpu_custom_call.1} parent=35 // pred_check
          %p300 = pneg %p126
        $region46: #{tpu_custom_call.1} parent=35 // pred_check_branch
          %302 = sbr.rel (%p300) target = $region48
        $region47: #{tpu_custom_call.1} parent=35 // pred_region
          %304 = dma.done [#allocation6], 512
        $region48: #{tpu_custom_call.1} parent=35 // pred_fallthru
          _
        %s305 = sand.u32 %s50, 1
        %s306 = scalar_lea.sflag [#allocation3], %s305
        %s307 = sand.u32 %s50, 1
        %s308 = smul.addr %s307, 8
        %s309 = scalar_lea.vmem [#allocation2], %s308
        %p310 = pneg %p63
        %p311 = pneg %p60
        %p312 = pneg %p84
        %p313 = pneg %p81
        %p314 = pneg %p105
        %p315 = pneg %p102
        %p316 = pneg %p126
        %p317 = pneg %p123
        %p318 = pneg %p154
        %p319 = pneg %p151
        %s320 = sand.u32 %s141, 1
        %s321 = scalar_lea.sflag [#allocation4], %s320
        %s322 = sand.u32 %s141, 1
        %s323 = smul.addr %s322, 32
        %s324 = scalar_lea.vmem [#allocation8], %s323
        %p325 = pneg %p182
        %p326 = pneg %p179
        %s327 = sand.u32 %s28, 1
        %s328 = scalar_lea.sflag [#allocation10], %s327
        %s329 = sand.u32 %s169, 1
        %s330 = smul.addr %s329, 32
        %s331 = scalar_lea.vmem [#allocation9], %s330
        %p332 = pneg %p210
        %p333 = pneg %p207
        %s334 = sand.u32 %s28, 1
        %s335 = scalar_lea.sflag [#allocation10], %s334
        %s336 = sand.u32 %s197, 1
        %s337 = smul.addr %s336, 32
        %s338 = scalar_lea.vmem [#allocation11], %s337
        %v339 = vld [vmem:[%s289] sm:$0xff]
        %vm340 = vcmask 261120
        %v341 = vsel %vm340, %v339, 0.0
        %342 = vadd.xlane.f32.xlu0 %v341
        %v343 = vpop.xlane.xlu0 %342
        %v344 = vrcp.pop 32.0
        %v345 = vmul.f32 32.0, %v344
        %v346 = vsub.f32 1.0, %v345
        %v347 = vmul.f32 %v344, %v346
        %v348 = vadd.f32 %v344, %v347
        %vm349 = vweird.f32 %v344
        %v350 = vsel %vm349, %v344, %v348
        %v351 = vmul.f32 %v343, %v350
        %v352 = vsub.f32 %v339, %v351
        %v353 = vmul.f32 %v352, %v352
        %v354 = vsel %vm340, %v353, 0.0
        %355 = vadd.xlane.f32.xlu0 %v354
        %v356 = vpop.xlane.xlu0 %355
        %v357 = vmul.f32 %v356, %v350
        %v358 = vadd.f32 %v357, 1e-05
        %v359 = vrsqrt.pop %v358
        %v360 = vmul.f32 %v359, %v358
        %v361 = vmul.f32 %v360, %v359
        %v362 = vmul.f32 0.5, %v361
        %v363 = vsub.f32 1.5, %v362
        %v364 = vmul.f32 %v359, %v363
        %vm365 = vweird.f32 %v358
        %vm366 = vweird.f32 %v359
        %vm367 = vmor %vm365, %vm366
        %v368 = vsel %vm367, %v359, %v364
        %v369 = vmul.f32 %v352, %v368
        %v370 = vld [vmem:[#allocation5] sm:$0x1]
        %v372 = vperm.slane %v370, 0
        %v374 = vmul.f32 %v369, %v372
        %v375 = vld [vmem:[%s2] sm:$0x1]
        %v377 = vperm.slane %v375, 0
        %v379 = vadd.f32 %v374, %v377
        %v380 = vld [vmem:[#allocation7] sm:$0xff]
        %v381 = vld [vmem:[#allocation7 + $0x8] sm:$0xff]
        %v382 = vld [vmem:[#allocation7 + $0x10] sm:$0xff]
        %v383 = vld [vmem:[#allocation7 + $0x18] sm:$0xff]
        %v385 = vsel %vm340, %v379, 0
        %387 = vmatpush.msra.mxu0 0.0
        %388 = vmatpush.msra.mxu0 0.0
        %389 = vmatpush.msra.mxu0 0.0
        %390 = vmatpush.msra.mxu0 0.0
        %391 = vmatpush.msra.mxu0 0.0
        %392 = vmatpush.msra.mxu0 0.0
        %393 = vmatpush.msra.mxu0 0.0
        %394 = vmatpush.msra.mxu0 0.0
        %395 = vmatpush.msra.mxu0 0.0
        %396 = vmatpush.msra.mxu0 0.0
        %397 = vmatpush.msra.mxu0 0.0
        %398 = vmatpush.msra.mxu0 0.0
        %399 = vmatpush.msra.mxu0 %v383
        %400 = vmatpush.msra.mxu0 %v382
        %401 = vmatpush.msra.mxu0 %v381
        %402 = vmatpush.msra.mxu0 %v380
        %403 = vmatmul.f32.gmra.mxu0 %v385
        %v404 = vpop.f32.mrf.mxu0
        %v405 = vadd.f32 0.0, %v404
        %406 = vdwg.mxu0
        %vm407 = vcmask 64512
        %408 = vst.msk [vmem:[%s324] sm:$0xff] %vm407, %v405
        %410 = vrot.lane.b32.xlu0 %v405, 96
        %v411 = vpop.permute.xlu0 %410
        %413 = vst.msk [vmem:[%s331] sm:$0xff] %vm407, %v411
        %414 = vrot.lane.b32.xlu0 %v405, 64
        %v415 = vpop.permute.xlu0 %414
        %417 = vst.msk [vmem:[%s338] sm:$0xff] %vm407, %v415
        %418 = vrot.lane.b32.xlu0 %v405, 120
        %v419 = vpop.permute.xlu0 %418
        %s421 = scalar_lea.vmem %s324, 8 [#allocation8]
        %422 = vst.msk [vmem:[%s421] sm:$0xff] %vm407, %v419
        %423 = vrot.lane.b32.xlu0 %v405, 88
        %v424 = vpop.permute.xlu0 %423
        %s426 = scalar_lea.vmem %s331, 8 [#allocation9]
        %427 = vst.msk [vmem:[%s426] sm:$0xff] %vm407, %v424
        %428 = vrot.lane.b32.xlu0 %v405, 56
        %v429 = vpop.permute.xlu0 %428
        %s431 = scalar_lea.vmem %s338, 8 [#allocation11]
        %432 = vst.msk [vmem:[%s431] sm:$0xff] %vm407, %v429
        %433 = vrot.lane.b32.xlu0 %v405, 112
        %v434 = vpop.permute.xlu0 %433
        %s436 = scalar_lea.vmem %s324, 16 [#allocation8]
        %437 = vst.msk [vmem:[%s436] sm:$0xff] %vm407, %v434
        %438 = vrot.lane.b32.xlu0 %v405, 80
        %v439 = vpop.permute.xlu0 %438
        %s441 = scalar_lea.vmem %s331, 16 [#allocation9]
        %442 = vst.msk [vmem:[%s441] sm:$0xff] %vm407, %v439
        %443 = vrot.lane.b32.xlu0 %v405, 48
        %v444 = vpop.permute.xlu0 %443
        %s446 = scalar_lea.vmem %s338, 16 [#allocation11]
        %447 = vst.msk [vmem:[%s446] sm:$0xff] %vm407, %v444
        %448 = vrot.lane.b32.xlu0 %v405, 104
        %v449 = vpop.permute.xlu0 %448
        %s451 = scalar_lea.vmem %s324, 24 [#allocation8]
        %452 = vst.msk [vmem:[%s451] sm:$0xff] %vm407, %v449
        %453 = vrot.lane.b32.xlu0 %v405, 72
        %v454 = vpop.permute.xlu0 %453
        %s456 = scalar_lea.vmem %s331, 24 [#allocation9]
        %457 = vst.msk [vmem:[%s456] sm:$0xff] %vm407, %v454
        %458 = vrot.lane.b32.xlu0 %v405, 40
        %v459 = vpop.permute.xlu0 %458
        %s461 = scalar_lea.vmem %s338, 24 [#allocation11]
        %462 = vst.msk [vmem:[%s461] sm:$0xff] %vm407, %v459
        %s463 = sand.u32 %s141, 1
        %s464 = scalar_lea.sflag [#allocation4], %s463
        %s465 = sand.u32 %s141, 1
        %s466 = smul.addr %s465, 32
        %s467 = scalar_lea.vmem [#allocation8], %s466
        %s468 = sand.u32 %s28, 1
        %s469 = scalar_lea.sflag [#allocation10], %s468
        %s470 = sand.u32 %s169, 1
        %s471 = smul.addr %s470, 32
        %s472 = scalar_lea.vmem [#allocation9], %s471
        %s473 = sand.u32 %s28, 1
        %s474 = scalar_lea.sflag [#allocation10], %s473
        %s475 = sand.u32 %s197, 1
        %s476 = smul.addr %s475, 32
        %s477 = scalar_lea.vmem [#allocation11], %s476
        // Predicated region
        $region49: #{tpu_custom_call.1} parent=35 // pred_check
          %p478 = pneg %p151
        $region50: #{tpu_custom_call.1} parent=35 // pred_check_branch
          %480 = sbr.rel (%p478) target = $region52
        $region51: #{tpu_custom_call.1} parent=35 // pred_region
          %482 = vsyncadd %s464, 0
          %s483 = smul.addr %s32, 4
          %s484 = sadd.s32 %s33, %s483
          %s485 = smul.addr %s484, 8
          %s486 = scalar_lea.hbm %s4, %s485
          %s487 = sshll.u32 %s467, 4
          %s488 = int_to_ptr.vmem [resolvable:$true] %s487
          %s489 = sshll.u32 %s486, 4
          %s490 = int_to_ptr.hbm [resolvable:$true] %s489
          %495 = dma.vmem_to_hbm [thread:$0]  %s488, 512, %s490, %s464, 128, 128, 8
        $region52: #{tpu_custom_call.1} parent=35 // pred_fallthru
          _
        // Predicated region
        $region53: #{tpu_custom_call.1} parent=35 // pred_check
          %p496 = pneg %p179
        $region54: #{tpu_custom_call.1} parent=35 // pred_check_branch
          %498 = sbr.rel (%p496) target = $region56
        $region55: #{tpu_custom_call.1} parent=35 // pred_region
          %500 = vsyncadd %s469, 0
          %s501 = smul.addr %s32, 4
          %s502 = sadd.s32 %s33, %s501
          %s503 = smul.addr %s502, 8
          %s504 = scalar_lea.hbm %s5, %s503
          %s505 = sshll.u32 %s472, 4
          %s506 = int_to_ptr.vmem [resolvable:$true] %s505
          %s507 = sshll.u32 %s504, 4
          %s508 = int_to_ptr.hbm [resolvable:$true] %s507
          %513 = dma.vmem_to_hbm [thread:$0]  %s506, 512, %s508, %s469, 128, 128, 8
        $region56: #{tpu_custom_call.1} parent=35 // pred_fallthru
          _
        // Predicated region
        $region57: #{tpu_custom_call.1} parent=35 // pred_check
          %p514 = pneg %p207
        $region58: #{tpu_custom_call.1} parent=35 // pred_check_branch
          %516 = sbr.rel (%p514) target = $region60
        $region59: #{tpu_custom_call.1} parent=35 // pred_region
          %518 = vsyncadd %s474, 0
          %s519 = smul.addr %s32, 4
          %s520 = sadd.s32 %s33, %s519
          %s521 = smul.addr %s520, 8
          %s522 = scalar_lea.hbm %s6, %s521
          %s523 = sshll.u32 %s477, 4
          %s524 = int_to_ptr.vmem [resolvable:$true] %s523
          %s525 = sshll.u32 %s522, 4
          %s526 = int_to_ptr.hbm [resolvable:$true] %s525
          %531 = dma.vmem_to_hbm [thread:$0]  %s524, 512, %s526, %s474, 128, 128, 8
        $region60: #{tpu_custom_call.1} parent=35 // pred_fallthru
          _
      $region36: #{tpu_custom_call.1} parent=5 // pred_fallthru
        _
      %p532 = scmp.le.s32.totalorder 2, %s23
      // Predicated region
      $region61: #{tpu_custom_call.1} parent=5 // pred_check
        %p533 = pneg %p532
      $region62: #{tpu_custom_call.1} parent=5 // pred_check_branch
        %535 = sbr.rel (%p533) target = $region64
      $region63: #{tpu_custom_call.1} parent=5 // pred_region
        %s536 = ssub.s32 %s23, 2
        // Predicated region
        $region65: #{tpu_custom_call.1} parent=63 // pred_check
          %p537 = pneg %p157
        $region66: #{tpu_custom_call.1} parent=63 // pred_check_branch
          %539 = sbr.rel (%p537) target = $region68
        $region67: #{tpu_custom_call.1} parent=63 // pred_region
          %s540 = sand.u32 %s142, 1
          %s541 = scalar_lea.sflag [#allocation4], %s540
          %s542 = sand.u32 %s142, 1
          %s543 = smul.addr %s542, 32
          %s544 = scalar_lea.vmem [#allocation8], %s543
          %546 = dma.done %s541, 512
        $region68: #{tpu_custom_call.1} parent=63 // pred_fallthru
          _
        // Predicated region
        $region69: #{tpu_custom_call.1} parent=63 // pred_check
          %p547 = pneg %p185
        $region70: #{tpu_custom_call.1} parent=63 // pred_check_branch
          %549 = sbr.rel (%p547) target = $region72
        $region71: #{tpu_custom_call.1} parent=63 // pred_region
          %s550 = sand.u32 %s29, 1
          %s551 = scalar_lea.sflag [#allocation10], %s550
          %s552 = sand.u32 %s170, 1
          %s553 = smul.addr %s552, 32
          %s554 = scalar_lea.vmem [#allocation9], %s553
          %556 = dma.done %s551, 512
        $region72: #{tpu_custom_call.1} parent=63 // pred_fallthru
          _
        // Predicated region
        $region73: #{tpu_custom_call.1} parent=63 // pred_check
          %p557 = pneg %p213
        $region74: #{tpu_custom_call.1} parent=63 // pred_check_branch
          %559 = sbr.rel (%p557) target = $region76
        $region75: #{tpu_custom_call.1} parent=63 // pred_region
          %s560 = sand.u32 %s29, 1
          %s561 = scalar_lea.sflag [#allocation10], %s560
          %s562 = sand.u32 %s198, 1
          %s563 = smul.addr %s562, 32
          %s564 = scalar_lea.vmem [#allocation11], %s563
          %566 = dma.done %s561, 512
        $region76: #{tpu_custom_call.1} parent=63 // pred_fallthru
          _
      $region64: #{tpu_custom_call.1} parent=5 // pred_fallthru
        _
    $region6: #{tpu_custom_call.1} parent=1 // loop_footer
      %s27 = sadd.s32 1, %s23
    $region7: #{tpu_custom_call.1} parent=1 // loop_footer_branch
      %22 = sbr.rel target = $region3
    $region8: #{tpu_custom_call.1} parent=1 // loop_exit
      _
    %567 = vsyncpa [#allocation3], 1
    %s568 = scalar_lea.sflag [#allocation3], 1
    %569 = vsyncpa %s568, 1
    %570 = vsyncpa [#allocation6], 1
    %571 = vsyncpa [#allocation4], 1
    %s572 = scalar_lea.sflag [#allocation4], 1
    %573 = vsyncpa %s572, 1
    %574 = vsyncpa [#allocation10], 1
    %s575 = scalar_lea.sflag [#allocation10], 1
    %576 = vsyncpa %s575, 1

// kernel: tpu_custom_call.1
$region0: #{tpu_custom_call.1}
  #allocation0 [shape = 'u32[]', space=smem, size = 0x4, offset = 0x4, fixed_abs, tag = 'smem constant byte address 0x4 - core index']
  #allocation1 [shape = 'u32[72,128]{1,0:T(1,128)}', space=vmem, size = 0x9000, scoped, tag = 'internal scratch']
  %s0 = inlined_call_operand.hbm [shape: f32[2,8,32], index: 0, kind: input, shape index: {}]
  %s1 = inlined_call_operand.hbm [shape: f32[1,32], index: 1, kind: input, shape index: {}]
  %s2 = inlined_call_operand.vmem [shape: f32[1,32], index: 2, kind: input, shape index: {}]
  %s3 = inlined_call_operand.hbm [shape: f32[32,96], index: 3, kind: input, shape index: {}]
  %s4 = inlined_call_operand.hbm [shape: f32[2,4,8,8], index: 4, kind: output, shape index: {0}]
  %s5 = inlined_call_operand.hbm [shape: f32[2,4,8,8], index: 5, kind: output, shape index: {1}]
  %s6 = inlined_call_operand.hbm [shape: f32[2,4,8,8], index: 6, kind: output, shape index: {2}]
  %7 = xla_tuple %s4, %s5, %s6
  %s8 = sld [smem:[#allocation0]]
  $region77: #{tpu_custom_call.1} parent=0
    _
  %s10 = ssub.s32 1, %s8
  %s11 = scalar_select 0, %s10, %s8
  $region1: #{tpu_custom_call.1} parent=0
    #allocation2 [shape = 'u8[8192]{0}', space=vmem, size = 0x2000, scoped, tag = 'input window, operand 0']
    #allocation3 [shape = 's32[2]{0}', space=sflag, size = 0x8, scoped, tag = 'scoped memory for tpu_custom_call.1']
    #allocation4 [shape = 's32[2]{0}', space=sflag, size = 0x8, scoped, tag = 'scoped memory for tpu_custom_call.1']
    #allocation5 [shape = 'u8[512]{0}', space=vmem, size = 0x400, scoped, tag = 'input window, operand 1, single buffered']
    #allocation6 [shape = 's32[1]{0}', space=sflag, size = 0x4, scoped, tag = 'scoped memory for tpu_custom_call.1']
    #allocation7 [shape = 'u8[16384]{0}', space=vmem, size = 0x4000, scoped, tag = 'input window, operand 3, single buffered']
    #allocation8 [shape = 'u8[32768]{0}', space=vmem, size = 0x8000, scoped, tag = 'output window, operand 0']
    #allocation9 [shape = 'u8[32768]{0}', space=vmem, size = 0x8000, scoped, tag = 'output window, operand 1']
    #allocation10 [shape = 's32[2]{0}', space=sflag, size = 0x8, scoped, tag = 'scoped memory for tpu_custom_call.1']
    #allocation11 [shape = 'u8[32768]{0}', space=vmem, size = 0x8000, scoped, tag = 'output window, operand 2']
    %12 = vsyncpa [#allocation3], 0
    %s13 = scalar_lea.sflag [#allocation3], 1
    %14 = vsyncpa %s13, 0
    %15 = vsyncpa [#allocation6], 0
    %16 = vsyncpa [#allocation4], 0
    %s17 = scalar_lea.sflag [#allocation4], 1
    %18 = vsyncpa %s17, 0
    %19 = vsyncpa [#allocation10], 0
    %s20 = scalar_lea.sflag [#allocation10], 1
    %21 = vsyncpa %s20, 0
    loop: start=0, step=1, limit=4
    $region2: #{tpu_custom_call.1} parent=1 // loop_pre_header
      _
    $region3: #{tpu_custom_call.1} parent=1 // loop_header
      %s23 = sphi 0, %s27
      %p24 = scmp.ge.s32.totalorder %s23, 4
      %s30 = sphi 0, %s42
      %s31 = sphi 0, %s38
      %s32 = sphi 0, %s30
      %s33 = sphi 0, %s31
      %s34 = sphi 0, %s32
      %s35 = sphi 0, %s33
      %s47 = sphi 0, %s49
      %s50 = sphi 0, %s47
      %s51 = sphi 0, %s50
      %s67 = sphi 0, %s51
      %s71 = sphi 0, %s71
      %s73 = sphi 0, %s71
      %s74 = sphi 0, %s73
      %s88 = sphi 0, %s74
      %s92 = sphi 0, %s92
      %s94 = sphi 0, %s92
      %s95 = sphi 0, %s94
      %s109 = sphi 0, %s95
      %s113 = sphi 0, %s113
      %s115 = sphi 0, %s113
      %s116 = sphi 0, %s115
      %s130 = sphi 0, %s116
      %s138 = sphi 0, %s140
      %s141 = sphi 0, %s138
      %s142 = sphi 0, %s141
      %s158 = sphi 0, %s142
      %s166 = sphi 0, %s168
      %s169 = sphi 0, %s166
      %s170 = sphi 0, %s169
      %s186 = sphi 0, %s170
      %s194 = sphi 0, %s196
      %s197 = sphi 0, %s194
      %s198 = sphi 0, %s197
      %s214 = sphi 0, %s198
    $region4: #{tpu_custom_call.1} parent=1 // loop_header_branch
      %26 = sbr.rel (%p24) target = $region8
    $region5: #{tpu_custom_call.1} parent=1 // loop_body
      %s28 = ssub.s32 %s23, 1
      %s29 = ssub.s32 %s23, 2
      %s36 = sadd.s32 1, %s31
      %p37 = scmp.ge.s32.totalorder %s36, 1
      %s38 = scalar_select %p37, 0, %s36
      %s39 = sadd.s32 1, %s30
      %s40 = scalar_select %p37, %s39, %s30
      %p41 = scmp.ge.s32.totalorder %s40, 2
      %s42 = scalar_select %p41, 0, %s40
      %s43 = ssub.s32 %s30, %s42
      %s44 = ssub.s32 %s31, %s38
      %s45 = sor.u32 %s43, %s44
      %p46 = scmp.eq.s32.totalorder %s45, 0
      %s48 = sadd.s32 %s47, 1
      %s49 = scalar_select %p46, %s47, %s48
      %p52 = pneg %p46
      %p53 = scmp.eq.s32.totalorder %s23, 1
      %p54 = por %p52, %p53
      %p55 = scmp.ne.s32.totalorder %s47, %s50
      %p56 = scmp.eq.s32.totalorder %s23, 0
      %p57 = por %p55, %p56
      %p58 = scmp.ne.s32.totalorder %s47, %s50
      %p59 = scmp.eq.s32.totalorder %s28, 1
      %p60 = por %p58, %p59
      %p61 = scmp.ne.s32.totalorder %s50, %s51
      %p62 = scmp.eq.s32.totalorder %s28, 0
      %p63 = por %p61, %p62
      %p64 = scmp.ne.s32.totalorder %s50, %s51
      %p65 = scmp.eq.s32.totalorder %s29, 1
      %p66 = por %p64, %p65
      %p68 = scmp.ne.s32.totalorder %s51, %s67
      %p69 = scmp.eq.s32.totalorder %s29, 0
      %p70 = por %p68, %p69
      %s72 = sadd.s32 %s71, 1
      %p75 = scmp.eq.s32.totalorder %s23, 1
      %p76 = scmp.ne.s32.totalorder %s71, %s73
      %p77 = scmp.eq.s32.totalorder %s23, 0
      %p78 = por %p76, %p77
      %p79 = scmp.ne.s32.totalorder %s71, %s73
      %p80 = scmp.eq.s32.totalorder %s28, 1
      %p81 = por %p79, %p80
      %p82 = scmp.ne.s32.totalorder %s73, %s74
      %p83 = scmp.eq.s32.totalorder %s28, 0
      %p84 = por %p82, %p83
      %p85 = scmp.ne.s32.totalorder %s73, %s74
      %p86 = scmp.eq.s32.totalorder %s29, 1
      %p87 = por %p85, %p86
      %p89 = scmp.ne.s32.totalorder %s74, %s88
      %p90 = scmp.eq.s32.totalorder %s29, 0
      %p91 = por %p89, %p90
      %s93 = sadd.s32 %s92, 1
      %p96 = scmp.eq.s32.totalorder %s23, 1
      %p97 = scmp.ne.s32.totalorder %s92, %s94
      %p98 = scmp.eq.s32.totalorder %s23, 0
      %p99 = por %p97, %p98
      %p100 = scmp.ne.s32.totalorder %s92, %s94
      %p101 = scmp.eq.s32.totalorder %s28, 1
      %p102 = por %p100, %p101
      %p103 = scmp.ne.s32.totalorder %s94, %s95
      %p104 = scmp.eq.s32.totalorder %s28, 0
      %p105 = por %p103, %p104
      %p106 = scmp.ne.s32.totalorder %s94, %s95
      %p107 = scmp.eq.s32.totalorder %s29, 1
      %p108 = por %p106, %p107
      %p110 = scmp.ne.s32.totalorder %s95, %s109
      %p111 = scmp.eq.s32.totalorder %s29, 0
      %p112 = por %p110, %p111
      %s114 = sadd.s32 %s113, 1
      %p117 = scmp.eq.s32.totalorder %s23, 1
      %p118 = scmp.ne.s32.totalorder %s113, %s115
      %p119 = scmp.eq.s32.totalorder %s23, 0
      %p120 = por %p118, %p119
      %p121 = scmp.ne.s32.totalorder %s113, %s115
      %p122 = scmp.eq.s32.totalorder %s28, 1
      %p123 = por %p121, %p122
      %p124 = scmp.ne.s32.totalorder %s115, %s116
      %p125 = scmp.eq.s32.totalorder %s28, 0
      %p126 = por %p124, %p125
      %p127 = scmp.ne.s32.totalorder %s115, %s116
      %p128 = scmp.eq.s32.totalorder %s29, 1
      %p129 = por %p127, %p128
      %p131 = scmp.ne.s32.totalorder %s116, %s130
      %p132 = scmp.eq.s32.totalorder %s29, 0
      %p133 = por %p131, %p132
      %s134 = ssub.s32 %s30, %s42
      %s135 = ssub.s32 %s31, %s38
      %s136 = sor.u32 %s134, %s135
      %p137 = scmp.eq.s32.totalorder %s136, 0
      %s139 = sadd.s32 %s138, 1
      %s140 = scalar_select %p137, %s138, %s139
      %p143 = pneg %p137
      %p144 = scmp.eq.s32.totalorder %s23, 1
      %p145 = por %p143, %p144
      %p146 = scmp.ne.s32.totalorder %s138, %s141
      %p147 = scmp.eq.s32.totalorder %s23, 0
      %p148 = por %p146, %p147
      %p149 = scmp.ne.s32.totalorder %s138, %s141
      %p150 = scmp.eq.s32.totalorder %s28, 1
      %p151 = por %p149, %p150
      %p152 = scmp.ne.s32.totalorder %s141, %s142
      %p153 = scmp.eq.s32.totalorder %s28, 0
      %p154 = por %p152, %p153
      %p155 = scmp.ne.s32.totalorder %s141, %s142
      %p156 = scmp.eq.s32.totalorder %s29, 1
      %p157 = por %p155, %p156
      %p159 = scmp.ne.s32.totalorder %s142, %s158
      %p160 = scmp.eq.s32.totalorder %s29, 0
      %p161 = por %p159, %p160
      %s162 = ssub.s32 %s30, %s42
      %s163 = ssub.s32 %s31, %s38
      %s164 = sor.u32 %s162, %s163
      %p165 = scmp.eq.s32.totalorder %s164, 0
      %s167 = sadd.s32 %s166, 1
      %s168 = scalar_select %p165, %s166, %s167
      %p171 = pneg %p165
      %p172 = scmp.eq.s32.totalorder %s23, 1
      %p173 = por %p171, %p172
      %p174 = scmp.ne.s32.totalorder %s166, %s169
      %p175 = scmp.eq.s32.totalorder %s23, 0
      %p176 = por %p174, %p175
      %p177 = scmp.ne.s32.totalorder %s166, %s169
      %p178 = scmp.eq.s32.totalorder %s28, 1
      %p179 = por %p177, %p178
      %p180 = scmp.ne.s32.totalorder %s169, %s170
      %p181 = scmp.eq.s32.totalorder %s28, 0
      %p182 = por %p180, %p181
      %p183 = scmp.ne.s32.totalorder %s169, %s170
      %p184 = scmp.eq.s32.totalorder %s29, 1
      %p185 = por %p183, %p184
      %p187 = scmp.ne.s32.totalorder %s170, %s186
      %p188 = scmp.eq.s32.totalorder %s29, 0
      %p189 = por %p187, %p188
      %s190 = ssub.s32 %s30, %s42
      %s191 = ssub.s32 %s31, %s38
      %s192 = sor.u32 %s190, %s191
      %p193 = scmp.eq.s32.totalorder %s192, 0
      %s195 = sadd.s32 %s194, 1
      %s196 = scalar_select %p193, %s194, %s195
      %p199 = pneg %p193
      %p200 = scmp.eq.s32.totalorder %s23, 1
      %p201 = por %p199, %p200
      %p202 = scmp.ne.s32.totalorder %s194, %s197
      %p203 = scmp.eq.s32.totalorder %s23, 0
      %p204 = por %p202, %p203
      %p205 = scmp.ne.s32.totalorder %s194, %s197
      %p206 = scmp.eq.s32.totalorder %s28, 1
      %p207 = por %p205, %p206
      %p208 = scmp.ne.s32.totalorder %s197, %s198
      %p209 = scmp.eq.s32.totalorder %s28, 0
      %p210 = por %p208, %p209
      %p211 = scmp.ne.s32.totalorder %s197, %s198
      %p212 = scmp.eq.s32.totalorder %s29, 1
      %p213 = por %p211, %p212
      %p215 = scmp.ne.s32.totalorder %s198, %s214
      %p216 = scmp.eq.s32.totalorder %s29, 0
      %p217 = por %p215, %p216
      %p218 = scmp.le.s32.totalorder 1, %s23
      %p219 = scmp.lt.s32.totalorder %s23, 3
      %p220 = pnand %p218, %p219
      %p221 = pneg %p220
      // Predicated region
      $region9: #{tpu_custom_call.1} parent=5 // pred_check
        _
      $region10: #{tpu_custom_call.1} parent=5 // pred_check_branch
        %223 = sbr.rel (%p220) target = $region12
      $region11: #{tpu_custom_call.1} parent=5 // pred_region
        %s224 = ssub.s32 %s23, 1
        // Predicated region
        $region13: #{tpu_custom_call.1} parent=11 // pred_check
          %p225 = pneg %p84
        $region14: #{tpu_custom_call.1} parent=11 // pred_check_branch
          %227 = sbr.rel (%p225) target = $region16
        $region15: #{tpu_custom_call.1} parent=11 // pred_region
          %229 = vsyncadd [#allocation6], 0
          %s231 = sshll.u32 %s1, 4
          %s232 = int_to_ptr.hbm [resolvable:$true] %s231
          %s233 = sshll.u32 [#allocation5], 4
          %s234 = int_to_ptr.vmem [resolvable:$true] %s233
          %236 = dma.hbm_to_vmem [thread:$0]  %s232, 16, %s234, [#allocation6]
        $region16: #{tpu_custom_call.1} parent=11 // pred_fallthru
          _
        // Predicated region
        $region17: #{tpu_custom_call.1} parent=11 // pred_check
          %p237 = pneg %p105
        $region18: #{tpu_custom_call.1} parent=11 // pred_check_branch
          %239 = sbr.rel (%p237) target = $region20
        $region19: #{tpu_custom_call.1} parent=11 // pred_region
          _
        $region20: #{tpu_custom_call.1} parent=11 // pred_fallthru
          _
        // Predicated region
        $region21: #{tpu_custom_call.1} parent=11 // pred_check
          %p240 = pneg %p126
        $region22: #{tpu_custom_call.1} parent=11 // pred_check_branch
          %242 = sbr.rel (%p240) target = $region24
        $region23: #{tpu_custom_call.1} parent=11 // pred_region
          %244 = vsyncadd [#allocation6], 0
          %s245 = sshll.u32 %s3, 4
          %s246 = int_to_ptr.hbm [resolvable:$true] %s245
          %s247 = sshll.u32 [#allocation7], 4
          %s248 = int_to_ptr.vmem [resolvable:$true] %s247
          %253 = dma.hbm_to_vmem [thread:$0]  %s246, 512, %s248, [#allocation6], 128, 128, 8
        $region24: #{tpu_custom_call.1} parent=11 // pred_fallthru
          _
      $region12: #{tpu_custom_call.1} parent=5 // pred_fallthru
        _
      %p254 = scmp.lt.s32.totalorder %s23, 2
      // Predicated region
      $region25: #{tpu_custom_call.1} parent=5 // pred_check
        %p255 = pneg %p254
      $region26: #{tpu_custom_call.1} parent=5 // pred_check_branch
        %257 = sbr.rel (%p255) target = $region28
      $region27: #{tpu_custom_call.1} parent=5 // pred_region
        // Predicated region
        $region29: #{tpu_custom_call.1} parent=27 // pred_check
          %p258 = pneg %p57
        $region30: #{tpu_custom_call.1} parent=27 // pred_check_branch
          %260 = sbr.rel (%p258) target = $region32
        $region31: #{tpu_custom_call.1} parent=27 // pred_region
          %s261 = sand.u32 %s47, 1
          %s262 = scalar_lea.sflag [#allocation3], %s261
          %s263 = sand.u32 %s47, 1
          %s264 = smul.addr %s263, 8
          %s265 = scalar_lea.vmem [#allocation2], %s264
          %267 = vsyncadd %s262, 0
          %s268 = sadd.s32 %s31, %s30
          %s269 = smul.addr %s268, 8
          %s270 = scalar_lea.hbm %s0, %s269
          %s272 = sshll.u32 %s270, 4
          %s273 = int_to_ptr.hbm [resolvable:$true] %s272
          %s274 = sshll.u32 %s265, 4
          %s275 = int_to_ptr.vmem [resolvable:$true] %s274
          %277 = dma.hbm_to_vmem [thread:$0]  %s273, 128, %s275, %s262
        $region32: #{tpu_custom_call.1} parent=27 // pred_fallthru
          _
      $region28: #{tpu_custom_call.1} parent=5 // pred_fallthru
        _
      %p278 = scmp.le.s32.totalorder 1, %s23
      %p279 = scmp.lt.s32.totalorder %s23, 3
      %p280 = pnand %p278, %p279
      %p281 = pneg %p280
      // Predicated region
      $region33: #{tpu_custom_call.1} parent=5 // pred_check
        _
      $region34: #{tpu_custom_call.1} parent=5 // pred_check_branch
        %283 = sbr.rel (%p280) target = $region36
      $region35: #{tpu_custom_call.1} parent=5 // pred_region
        %s284 = ssub.s32 %s23, 1
        %s285 = sand.u32 %s50, 1
        %s286 = scalar_lea.sflag [#allocation3], %s285
        %s287 = sand.u32 %s50, 1
        %s288 = smul.addr %s287, 8
        %s289 = scalar_lea.vmem [#allocation2], %s288
        // Predicated region
        $region37: #{tpu_custom_call.1} parent=35 // pred_check
          %p290 = pneg %p63
        $region38: #{tpu_custom_call.1} parent=35 // pred_check_branch
          %292 = sbr.rel (%p290) target = $region40
        $region39: #{tpu_custom_call.1} parent=35 // pred_region
          %294 = dma.done %s286, 128
        $region40: #{tpu_custom_call.1} parent=35 // pred_fallthru
          _
        // Predicated region
        $region41: #{tpu_custom_call.1} parent=35 // pred_check
          %p295 = pneg %p84
        $region42: #{tpu_custom_call.1} parent=35 // pred_check_branch
          %297 = sbr.rel (%p295) target = $region44
        $region43: #{tpu_custom_call.1} parent=35 // pred_region
          %299 = dma.done [#allocation6], 16
        $region44: #{tpu_custom_call.1} parent=35 // pred_fallthru
          _
        // Predicated region
        $region45: #{tpu_custom_call.1} parent=35 // pred_check
          %p300 = pneg %p126
        $region46: #{tpu_custom_call.1} parent=35 // pred_check_branch
          %302 = sbr.rel (%p300) target = $region48
        $region47: #{tpu_custom_call.1} parent=35 // pred_region
          %304 = dma.done [#allocation6], 512
        $region48: #{tpu_custom_call.1} parent=35 // pred_fallthru
          _
        %s305 = sand.u32 %s50, 1
        %s306 = scalar_lea.sflag [#allocation3], %s305
        %s307 = sand.u32 %s50, 1
        %s308 = smul.addr %s307, 8
        %s309 = scalar_lea.vmem [#allocation2], %s308
        %p310 = pneg %p63
        %p311 = pneg %p60
        %p312 = pneg %p84
        %p313 = pneg %p81
        %p314 = pneg %p105
        %p315 = pneg %p102
        %p316 = pneg %p126
        %p317 = pneg %p123
        %p318 = pneg %p154
        %p319 = pneg %p151
        %s320 = sand.u32 %s141, 1
        %s321 = scalar_lea.sflag [#allocation4], %s320
        %s322 = sand.u32 %s141, 1
        %s323 = smul.addr %s322, 32
        %s324 = scalar_lea.vmem [#allocation8], %s323
        %p325 = pneg %p182
        %p326 = pneg %p179
        %s327 = sand.u32 %s28, 1
        %s328 = scalar_lea.sflag [#allocation10], %s327
        %s329 = sand.u32 %s169, 1
        %s330 = smul.addr %s329, 32
        %s331 = scalar_lea.vmem [#allocation9], %s330
        %p332 = pneg %p210
        %p333 = pneg %p207
        %s334 = sand.u32 %s28, 1
        %s335 = scalar_lea.sflag [#allocation10], %s334
        %s336 = sand.u32 %s197, 1
        %s337 = smul.addr %s336, 32
        %s338 = scalar_lea.vmem [#allocation11], %s337
        %v339 = vld [vmem:[%s289] sm:$0xff]
        %vm340 = vcmask 261120
        %v341 = vsel %vm340, %v339, 0.0
        %342 = vadd.xlane.f32.xlu0 %v341
        %v343 = vpop.xlane.xlu0 %342
        %v344 = vrcp.pop 32.0
        %v345 = vmul.f32 32.0, %v344
        %v346 = vsub.f32 1.0, %v345
        %v347 = vmul.f32 %v344, %v346
        %v348 = vadd.f32 %v344, %v347
        %vm349 = vweird.f32 %v344
        %v350 = vsel %vm349, %v344, %v348
        %v351 = vmul.f32 %v343, %v350
        %v352 = vsub.f32 %v339, %v351
        %v353 = vmul.f32 %v352, %v352
        %v354 = vsel %vm340, %v353, 0.0
        %355 = vadd.xlane.f32.xlu0 %v354
        %v356 = vpop.xlane.xlu0 %355
        %v357 = vmul.f32 %v356, %v350
        %v358 = vadd.f32 %v357, 1e-05
        %v359 = vrsqrt.pop %v358
        %v360 = vmul.f32 %v359, %v358
        %v361 = vmul.f32 %v360, %v359
        %v362 = vmul.f32 0.5, %v361
        %v363 = vsub.f32 1.5, %v362
        %v364 = vmul.f32 %v359, %v363
        %vm365 = vweird.f32 %v358
        %vm366 = vweird.f32 %v359
        %vm367 = vmor %vm365, %vm366
        %v368 = vsel %vm367, %v359, %v364
        %v369 = vmul.f32 %v352, %v368
        %v370 = vld [vmem:[#allocation5] sm:$0x1]
        %v372 = vperm.slane %v370, 0
        %v374 = vmul.f32 %v369, %v372
        %v375 = vld [vmem:[%s2] sm:$0x1]
        %v377 = vperm.slane %v375, 0
        %v379 = vadd.f32 %v374, %v377
        %v380 = vld [vmem:[#allocation7] sm:$0xff]
        %v381 = vld [vmem:[#allocation7 + $0x8] sm:$0xff]
        %v382 = vld [vmem:[#allocation7 + $0x10] sm:$0xff]
        %v383 = vld [vmem:[#allocation7 + $0x18] sm:$0xff]
        %v385 = vsel %vm340, %v379, 0
        %387 = vmatpush.msra.mxu0 0.0
        %388 = vmatpush.msra.mxu0 0.0
        %389 = vmatpush.msra.mxu0 0.0
        %390 = vmatpush.msra.mxu0 0.0
        %391 = vmatpush.msra.mxu0 0.0
        %392 = vmatpush.msra.mxu0 0.0
        %393 = vmatpush.msra.mxu0 0.0
        %394 = vmatpush.msra.mxu0 0.0
        %395 = vmatpush.msra.mxu0 0.0
        %396 = vmatpush.msra.mxu0 0.0
        %397 = vmatpush.msra.mxu0 0.0
        %398 = vmatpush.msra.mxu0 0.0
        %399 = vmatpush.msra.mxu0 %v383
        %400 = vmatpush.msra.mxu0 %v382
        %401 = vmatpush.msra.mxu0 %v381
        %402 = vmatpush.msra.mxu0 %v380
        %403 = vmatmul.f32.gmra.mxu0 %v385
        %v404 = vpop.f32.mrf.mxu0
        %v405 = vadd.f32 0.0, %v404
        %406 = vdwg.mxu0
        %vm407 = vcmask 64512
        %408 = vst.msk [vmem:[%s324] sm:$0xff] %vm407, %v405
        %410 = vrot.lane.b32.xlu0 %v405, 96
        %v411 = vpop.permute.xlu0 %410
        %413 = vst.msk [vmem:[%s331] sm:$0xff] %vm407, %v411
        %414 = vrot.lane.b32.xlu0 %v405, 64
        %v415 = vpop.permute.xlu0 %414
        %417 = vst.msk [vmem:[%s338] sm:$0xff] %vm407, %v415
        %418 = vrot.lane.b32.xlu0 %v405, 120
        %v419 = vpop.permute.xlu0 %418
        %s421 = scalar_lea.vmem %s324, 8 [#allocation8]
        %422 = vst.msk [vmem:[%s421] sm:$0xff] %vm407, %v419
        %423 = vrot.lane.b32.xlu0 %v405, 88
        %v424 = vpop.permute.xlu0 %423
        %s426 = scalar_lea.vmem %s331, 8 [#allocation9]
        %427 = vst.msk [vmem:[%s426] sm:$0xff] %vm407, %v424
        %428 = vrot.lane.b32.xlu0 %v405, 56
        %v429 = vpop.permute.xlu0 %428
        %s431 = scalar_lea.vmem %s338, 8 [#allocation11]
        %432 = vst.msk [vmem:[%s431] sm:$0xff] %vm407, %v429
        %433 = vrot.lane.b32.xlu0 %v405, 112
        %v434 = vpop.permute.xlu0 %433
        %s436 = scalar_lea.vmem %s324, 16 [#allocation8]
        %437 = vst.msk [vmem:[%s436] sm:$0xff] %vm407, %v434
        %438 = vrot.lane.b32.xlu0 %v405, 80
        %v439 = vpop.permute.xlu0 %438
        %s441 = scalar_lea.vmem %s331, 16 [#allocation9]
        %442 = vst.msk [vmem:[%s441] sm:$0xff] %vm407, %v439
        %443 = vrot.lane.b32.xlu0 %v405, 48
        %v444 = vpop.permute.xlu0 %443
        %s446 = scalar_lea.vmem %s338, 16 [#allocation11]
        %447 = vst.msk [vmem:[%s446] sm:$0xff] %vm407, %v444
        %448 = vrot.lane.b32.xlu0 %v405, 104
        %v449 = vpop.permute.xlu0 %448
        %s451 = scalar_lea.vmem %s324, 24 [#allocation8]
        %452 = vst.msk [vmem:[%s451] sm:$0xff] %vm407, %v449
        %453 = vrot.lane.b32.xlu0 %v405, 72
        %v454 = vpop.permute.xlu0 %453
        %s456 = scalar_lea.vmem %s331, 24 [#allocation9]
        %457 = vst.msk [vmem:[%s456] sm:$0xff] %vm407, %v454
        %458 = vrot.lane.b32.xlu0 %v405, 40
        %v459 = vpop.permute.xlu0 %458
        %s461 = scalar_lea.vmem %s338, 24 [#allocation11]
        %462 = vst.msk [vmem:[%s461] sm:$0xff] %vm407, %v459
        %s463 = sand.u32 %s141, 1
        %s464 = scalar_lea.sflag [#allocation4], %s463
        %s465 = sand.u32 %s141, 1
        %s466 = smul.addr %s465, 32
        %s467 = scalar_lea.vmem [#allocation8], %s466
        %s468 = sand.u32 %s28, 1
        %s469 = scalar_lea.sflag [#allocation10], %s468
        %s470 = sand.u32 %s169, 1
        %s471 = smul.addr %s470, 32
        %s472 = scalar_lea.vmem [#allocation9], %s471
        %s473 = sand.u32 %s28, 1
        %s474 = scalar_lea.sflag [#allocation10], %s473
        %s475 = sand.u32 %s197, 1
        %s476 = smul.addr %s475, 32
        %s477 = scalar_lea.vmem [#allocation11], %s476
        // Predicated region
        $region49: #{tpu_custom_call.1} parent=35 // pred_check
          %p478 = pneg %p151
        $region50: #{tpu_custom_call.1} parent=35 // pred_check_branch
          %480 = sbr.rel (%p478) target = $region52
        $region51: #{tpu_custom_call.1} parent=35 // pred_region
          %482 = vsyncadd %s464, 0
          %s483 = smul.addr %s32, 4
          %s484 = sadd.s32 %s33, %s483
          %s485 = smul.addr %s484, 8
          %s486 = scalar_lea.hbm %s4, %s485
          %s487 = sshll.u32 %s467, 4
          %s488 = int_to_ptr.vmem [resolvable:$true] %s487
          %s489 = sshll.u32 %s486, 4
          %s490 = int_to_ptr.hbm [resolvable:$true] %s489
          %495 = dma.vmem_to_hbm [thread:$0]  %s488, 512, %s490, %s464, 128, 128, 8
        $region52: #{tpu_custom_call.1} parent=35 // pred_fallthru
          _
        // Predicated region
        $region53: #{tpu_custom_call.1} parent=35 // pred_check
          %p496 = pneg %p179
        $region54: #{tpu_custom_call.1} parent=35 // pred_check_branch
          %498 = sbr.rel (%p496) target = $region56
        $region55: #{tpu_custom_call.1} parent=35 // pred_region
          %500 = vsyncadd %s469, 0
          %s501 = smul.addr %s32, 4
          %s502 = sadd.s32 %s33, %s501
          %s503 = smul.addr %s502, 8
          %s504 = scalar_lea.hbm %s5, %s503
          %s505 = sshll.u32 %s472, 4
          %s506 = int_to_ptr.vmem [resolvable:$true] %s505
          %s507 = sshll.u32 %s504, 4
          %s508 = int_to_ptr.hbm [resolvable:$true] %s507
          %513 = dma.vmem_to_hbm [thread:$0]  %s506, 512, %s508, %s469, 128, 128, 8
        $region56: #{tpu_custom_call.1} parent=35 // pred_fallthru
          _
        // Predicated region
        $region57: #{tpu_custom_call.1} parent=35 // pred_check
          %p514 = pneg %p207
        $region58: #{tpu_custom_call.1} parent=35 // pred_check_branch
          %516 = sbr.rel (%p514) target = $region60
        $region59: #{tpu_custom_call.1} parent=35 // pred_region
          %518 = vsyncadd %s474, 0
          %s519 = smul.addr %s32, 4
          %s520 = sadd.s32 %s33, %s519
          %s521 = smul.addr %s520, 8
          %s522 = scalar_lea.hbm %s6, %s521
          %s523 = sshll.u32 %s477, 4
          %s524 = int_to_ptr.vmem [resolvable:$true] %s523
          %s525 = sshll.u32 %s522, 4
          %s526 = int_to_ptr.hbm [resolvable:$true] %s525
          %531 = dma.vmem_to_hbm [thread:$0]  %s524, 512, %s526, %s474, 128, 128, 8
        $region60: #{tpu_custom_call.1} parent=35 // pred_fallthru
          _
      $region36: #{tpu_custom_call.1} parent=5 // pred_fallthru
        _
      %p532 = scmp.le.s32.totalorder 2, %s23
      // Predicated region
      $region61: #{tpu_custom_call.1} parent=5 // pred_check
        %p533 = pneg %p532
      $region62: #{tpu_custom_call.1} parent=5 // pred_check_branch
        %535 = sbr.rel (%p533) target = $region64
      $region63: #{tpu_custom_call.1} parent=5 // pred_region
        %s536 = ssub.s32 %s23, 2
        // Predicated region
        $region65: #{tpu_custom_call.1} parent=63 // pred_check
          %p537 = pneg %p157
        $region66: #{tpu_custom_call.1} parent=63 // pred_check_branch
          %539 = sbr.rel (%p537) target = $region68
        $region67: #{tpu_custom_call.1} parent=63 // pred_region
          %s540 = sand.u32 %s142, 1
          %s541 = scalar_lea.sflag [#allocation4], %s540
          %s542 = sand.u32 %s142, 1
          %s543 = smul.addr %s542, 32
          %s544 = scalar_lea.vmem [#allocation8], %s543
          %546 = dma.done %s541, 512
        $region68: #{tpu_custom_call.1} parent=63 // pred_fallthru
          _
        // Predicated region
        $region69: #{tpu_custom_call.1} parent=63 // pred_check
          %p547 = pneg %p185
        $region70: #{tpu_custom_call.1} parent=63 // pred_check_branch
          %549 = sbr.rel (%p547) target = $region72
        $region71: #{tpu_custom_call.1} parent=63 // pred_region
          %s550 = sand.u32 %s29, 1
          %s551 = scalar_lea.sflag [#allocation10], %s550
          %s552 = sand.u32 %s170, 1
          %s553 = smul.addr %s552, 32
          %s554 = scalar_lea.vmem [#allocation9], %s553
          %556 = dma.done %s551, 512
        $region72: #{tpu_custom_call.1} parent=63 // pred_fallthru
          _
        // Predicated region
        $region73: #{tpu_custom_call.1} parent=63 // pred_check
          %p557 = pneg %p213
        $region74: #{tpu_custom_call.1} parent=63 // pred_check_branch
          %559 = sbr.rel (%p557) target = $region76
        $region75: #{tpu_custom_call.1} parent=63 // pred_region
          %s560 = sand.u32 %s29, 1
          %s561 = scalar_lea.sflag [#allocation10], %s560
          %s562 = sand.u32 %s198, 1
          %s563 = smul.addr %s562, 32
          %s564 = scalar_lea.vmem [#allocation11], %s563
          %566 = dma.done %s561, 512
        $region76: #{tpu_custom_call.1} parent=63 // pred_fallthru
          _
      $region64: #{tpu_custom_call.1} parent=5 // pred_fallthru
        _
    $region6: #{tpu_custom_call.1} parent=1 // loop_footer
      %s27 = sadd.s32 1, %s23
    $region7: #{tpu_custom_call.1} parent=1 // loop_footer_branch
      %22 = sbr.rel target = $region3
    $region8: #{tpu_custom_call.1} parent=1 // loop_exit
      _
    %567 = vsyncpa [#allocation3], 1
    %s568 = scalar_lea.sflag [#allocation3], 1
    %569 = vsyncpa %s568, 1
    %570 = vsyncpa [#allocation6], 1
    %571 = vsyncpa [#allocation4], 1
    %s572 = scalar_lea.sflag [#allocation4], 1
    %573 = vsyncpa %s572, 1
    %574 = vsyncpa [#allocation10], 1
    %s575 = scalar_lea.sflag [#allocation10], 1
    %576 = vsyncpa %s575, 1

</llo_original>
